<compile_context>
chip_gen: v7x
topology: tpu7x:2x2x1
jax: 0.10.0
libtpu: 0.0.40
codegen_flags: <defaults>
</compile_context>

<pallas_src>
import jax
import jax.numpy as jnp
from jax.experimental import pallas as pl
from jax.experimental.pallas import tpu as pltpu

_ALIGN = 16  # batch-tile alignment (covers f32 (8,...) and bf16 (16,...) sublane tiles)


def _round_up(x: int, m: int) -> int:
    return ((x + m - 1) // m) * m


def _mlp_kernel(xs_ref, xd_ref, w1s_ref, w1d_ref, b1_ref, w2_ref, b2_ref,
                w3_ref, b3_ref, o_ref):
    """One batch tile of the 3-layer MLP (Linear+ReLU, Linear+ReLU, Linear+Sigmoid).

    xs: (TB, d_s)   sample embeddings      xd: (TB, d_d)  dataset embeddings
    w1s/w1d: (d_s/d_d, HPAD)  layer-1 split along the concat axis (fused torch.cat)
    w2: (HPAD, HPAD)  w3: (HPAD, OPAD)  biases (f32): (1, HPAD)/(1, OPAD)
    o:  (TB, OPAD)  lane-dense output tile (OPAD % 128 == 0, unmasked vst)
    """
    w_dtype = w1s_ref.dtype
    xs = xs_ref[...].astype(w_dtype)   # no-op when inputs are already bf16
    xd = xd_ref[...].astype(w_dtype)

    # Fused concat: cat(xs, xd) @ W1 == xs @ W1[:d_s, :] + xd @ W1[d_s:, :]
    h1 = (jnp.dot(xs, w1s_ref[...], preferred_element_type=jnp.float32)
          + jnp.dot(xd, w1d_ref[...], preferred_element_type=jnp.float32)
          + b1_ref[...])
    h1 = jnp.maximum(h1, 0.0)                                   # ReLU

    h2 = jnp.dot(h1.astype(w_dtype), w2_ref[...],
                 preferred_element_type=jnp.float32) + b2_ref[...]
    h2 = jnp.maximum(h2, 0.0)                                   # ReLU

    y = jnp.dot(h2.astype(w_dtype), w3_ref[...],
                preferred_element_type=jnp.float32) + b3_ref[...]
    o_ref[...] = jax.nn.sigmoid(y).astype(o_ref.dtype)          # Sigmoid


def init_params(key, input_size, hidden_size, output_size):
    """torch.nn.Linear-style params, PyTorch layout (out_features, in_features)."""
    keys = jax.random.split(key, 6)

    def _linear(kw, kb, fan_in, fan_out):
        bound = 1.0 / jnp.sqrt(jnp.float32(fan_in))
        w = jax.random.uniform(kw, (fan_out, fan_in), jnp.float32, -bound, bound)
        b = jax.random.uniform(kb, (fan_out,), jnp.float32, -bound, bound)
        return w, b

    w1, b1 = _linear(keys[0], keys[1], input_size, hidden_size)
    w2, b2 = _linear(keys[2], keys[3], hidden_size, hidden_size)
    w3, b3 = _linear(keys[4], keys[5], hidden_size, output_size)
    return (w1, b1, w2, b2, w3, b3)


def prepare_params(params, d_sample, d_dataset, param_dtype=jnp.bfloat16):
    """One-time prep (outside the per-call hot path): transpose to (in, out),
    split layer 1 along the concat axis, zero-pad hidden/output to lane-dense
    multiples of 128. bf16 by default (MXU-native, half the DMA/VMEM); f32
    accumulation is kept in the kernel either way. Biases stay f32."""
    w1, b1, w2, b2, w3, b3 = params
    hidden_size = w1.shape[0]
    output_size = w3.shape[0]
    hpad = _round_up(hidden_size, 128)
    opad = _round_up(output_size, 128)

    def _pad2(a, rows, cols):
        return jnp.pad(a, ((0, rows - a.shape[0]), (0, cols - a.shape[1])))

    w1s = _pad2(w1[:, :d_sample].T.astype(param_dtype), d_sample, hpad)
    w1d = _pad2(w1[:, d_sample:].T.astype(param_dtype), d_dataset, hpad)
    w2t = _pad2(w2.T.astype(param_dtype), hpad, hpad)
    w3t = _pad2(w3.T.astype(param_dtype), hpad, opad)
    b1p = _pad2(b1.reshape(1, -1).astype(jnp.float32), 1, hpad)
    b2p = _pad2(b2.reshape(1, -1).astype(jnp.float32), 1, hpad)
    b3p = _pad2(b3.reshape(1, -1).astype(jnp.float32), 1, opad)

    return dict(w1s=w1s, w1d=w1d, b1=b1p, w2=w2t, b2=b2p, w3=w3t, b3=b3p,
                d_sample=d_sample, d_dataset=d_dataset,
                hidden_pad=hpad, output_pad=opad, output_size=output_size)


def _choose_tile_b(batch: int, tile_b: int) -> int:
    """Pick a batch tile: multiple of 16, as large as requested, but keep the
    grid at >= 2 (and even) steps when the batch allows it (v7x megacore)."""
    tile_b = max(_ALIGN, _round_up(tile_b, _ALIGN))
    b_aligned = _round_up(batch, _ALIGN)
    tile_b = min(tile_b, b_aligned)
    if b_aligned >= 2 * _ALIGN:
        half = _round_up((b_aligned + 1) // 2, _ALIGN)
        tile_b = min(tile_b, half)
    # Avoid an odd grid length > 1 (would leave one v7x TC imbalanced).
    n_tiles = -(-b_aligned // tile_b)
    if n_tiles > 1 and n_tiles % 2 == 1:
        n_tiles += 1
        tile_b = _round_up(-(-b_aligned // n_tiles), _ALIGN)
    return tile_b


def learner_mlp_forward_batched(sample_emb, dataset_emb, prepped,
                                tile_b=2048, return_padded=False):
    """Pallas forward for a batch of (sample_embedding, dataset_embedding) pairs.

    sample_emb:  (B, d_sample)   dataset_emb: (B, d_dataset)
    returns:     (B, output_size) f32, or the padded (b_pad, 128) lane-dense
                 slab if return_padded=True (lets the consumer fuse the slice
                 and avoid an extra HBM read+write of the padded output).
    """
    assert sample_emb.ndim == 2 and dataset_emb.ndim == 2
    B = sample_emb.shape[0]
    d_s = prepped["d_sample"]
    d_d = prepped["d_dataset"]
    hpad = prepped["hidden_pad"]
    opad = prepped["output_pad"]
    out_size = prepped["output_size"]
    w_dtype = prepped["w1s"].dtype

    tile_b = _choose_tile_b(B, tile_b)
    b_pad = _round_up(B, tile_b)

    # Activations travel in the weight dtype (bf16 by default): half the input
    # DMA and MXU-native matmuls. Accumulation stays f32 inside the kernel.
    sample_emb = sample_emb.astype(w_dtype)
    dataset_emb = dataset_emb.astype(w_dtype)
    if b_pad != B:
        sample_emb = jnp.pad(sample_emb, ((0, b_pad - B), (0, 0)))
        dataset_emb = jnp.pad(dataset_emb, ((0, b_pad - B), (0, 0)))

    grid = (b_pad // tile_b,)

    # Weights/biases: block index is always (0, 0) -> grid-invariant, stay
    # resident in VMEM across all batch tiles (no per-step re-DMA).
    def _resident(shape):
        return pl.BlockSpec(shape, lambda b: (0, 0))

    itemsize = jnp.dtype(w_dtype).itemsize
    weight_bytes = sum(int(prepped[k].size) * int(prepped[k].dtype.itemsize)
                       for k in ("w1s", "w1d", "b1", "w2", "b2", "w3", "b3"))
    cost = pl.CostEstimate(
        flops=2 * b_pad * ((d_s + d_d) * hpad + hpad * hpad + hpad * opad),
        transcendentals=b_pad * opad,                      # sigmoid exp
        bytes_accessed=b_pad * (d_s + d_d) * itemsize + weight_bytes
                       + b_pad * opad * 4)

    out = pl.pallas_call(
        _mlp_kernel,
        out_shape=jax.ShapeDtypeStruct((b_pad, opad), jnp.float32),
        grid=grid,
        in_specs=[
            pl.BlockSpec((tile_b, d_s), lambda b: (b, 0)),   # sample tile
            pl.BlockSpec((tile_b, d_d), lambda b: (b, 0)),   # dataset tile
            _resident((d_s, hpad)),                          # w1 (sample rows)
            _resident((d_d, hpad)),                          # w1 (dataset rows)
            _resident((1, hpad)),                            # b1
            _resident((hpad, hpad)),                         # w2
            _resident((1, hpad)),                            # b2
            _resident((hpad, opad)),                         # w3
            _resident((1, opad)),                            # b3
        ],
        out_specs=pl.BlockSpec((tile_b, opad), lambda b: (b, 0)),
        compiler_params=pltpu.CompilerParams(
            dimension_semantics=("parallel",)),              # megacore on v7x
        cost_estimate=cost,
    )(sample_emb, dataset_emb,
      prepped["w1s"], prepped["w1d"], prepped["b1"],
      prepped["w2"], prepped["b2"], prepped["w3"], prepped["b3"])

    if return_padded:
        return out                     # (b_pad, opad) lane-dense slab
    return out[:B, :out_size]


def learner_mlp_forward(sample_embedding, dataset_embedding, prepped):
    """Single-pair forward matching LearnerMLP.forward: 1-D inputs, 1-D output.

    At B=1 a plain fused XLA dot chain beats any pallas_call (launch +
    pipeline prologue/epilogue + padded (8,128) output DMA dominate), so this
    path skips Pallas entirely. Same math, same prepped (padded) weights.
    """
    w_dtype = prepped["w1s"].dtype
    xs = sample_embedding.astype(w_dtype)[None, :]
    xd = dataset_embedding.astype(w_dtype)[None, :]
    h = (jnp.dot(xs, prepped["w1s"], preferred_element_type=jnp.float32)
         + jnp.dot(xd, prepped["w1d"], preferred_element_type=jnp.float32)
         + prepped["b1"])
    h = jnp.maximum(h, 0.0)
    h = jnp.dot(h.astype(w_dtype), prepped["w2"],
                preferred_element_type=jnp.float32) + prepped["b2"]
    h = jnp.maximum(h, 0.0)
    y = jnp.dot(h.astype(w_dtype), prepped["w3"],
                preferred_element_type=jnp.float32) + prepped["b3"]
    y = jax.nn.sigmoid(y)
    return y[0, :prepped["output_size"]]


if __name__ == "__main__":
    # Small shapes consistent with the module: two 16-dim embeddings
    # concatenated -> input_size=32, hidden_size=32, output_size=8.
    d_sample, d_dataset = 16, 16
    input_size = d_sample + d_dataset
    hidden_size = 32
    output_size = 8
    batch = 512

    key = jax.random.PRNGKey(0)
    k_params, k_s, k_d = jax.random.split(key, 3)

    params = init_params(k_params, input_size, hidden_size, output_size)
    sample_emb = jax.random.normal(k_s, (batch, d_sample), jnp.float32)
    dataset_emb = jax.random.normal(k_d, (batch, d_dataset), jnp.float32)

    # Reference in plain JAX f32 (same math as the PyTorch module).
    w1, b1, w2, b2, w3, b3 = params
    x = jnp.concatenate([sample_emb, dataset_emb], axis=1)
    h = jnp.maximum(x @ w1.T + b1, 0.0)
    h = jnp.maximum(h @ w2.T + b2, 0.0)
    y_ref = jax.nn.sigmoid(h @ w3.T + b3)

    # --- bf16 default path (performance configuration) ---
    prepped_bf16 = prepare_params(params, d_sample, d_dataset)          # bf16 weights
    fwd_bf16 = jax.jit(lambda s, d: learner_mlp_forward_batched(s, d, prepped_bf16))
    y_bf16 = fwd_bf16(sample_emb, dataset_emb)
    jax.block_until_ready(y_bf16)
    assert y_bf16.shape == (batch, output_size)
    assert jnp.allclose(y_bf16, y_ref, atol=3e-2), "bf16 batched mismatch vs reference"

    # --- f32 path: tight numeric check of the kernel structure ---
    prepped_f32 = prepare_params(params, d_sample, d_dataset, param_dtype=jnp.float32)
    fwd_f32 = jax.jit(lambda s, d: learner_mlp_forward_batched(s, d, prepped_f32))
    y_f32 = fwd_f32(sample_emb, dataset_emb)
    jax.block_until_ready(y_f32)
    assert jnp.allclose(y_f32, y_ref, atol=2e-5), "f32 batched mismatch vs reference"

    # --- single-pair path (exact LearnerMLP.forward signature, plain XLA) ---
    y1 = learner_mlp_forward(sample_emb[0], dataset_emb[0], prepped_bf16)
    jax.block_until_ready(y1)
    assert y1.shape == (output_size,)
    assert jnp.allclose(y1, y_ref[0], atol=3e-2), "single-sample mismatch"

    print("KERNEL_OK")
</pallas_src>

<mosaic_0001>
module attributes {stable_mosaic.version = 11 : i64} {
  func.func @_mlp_kernel(%arg0: i32, %arg1: memref<256x16xbf16, #tpu.memory_space<vmem>>, %arg2: memref<256x16xbf16, #tpu.memory_space<vmem>>, %arg3: memref<16x128xbf16, #tpu.memory_space<vmem>>, %arg4: memref<16x128xbf16, #tpu.memory_space<vmem>>, %arg5: memref<1x128xf32, #tpu.memory_space<vmem>>, %arg6: memref<128x128xbf16, #tpu.memory_space<vmem>>, %arg7: memref<1x128xf32, #tpu.memory_space<vmem>>, %arg8: memref<128x128xbf16, #tpu.memory_space<vmem>>, %arg9: memref<1x128xf32, #tpu.memory_space<vmem>>, %arg10: memref<256x128xf32, #tpu.memory_space<vmem>>) attributes {dimension_semantics = [#tpu.dimension_semantics<parallel>], iteration_bounds = array<i64: 2>, scalar_prefetch = 0 : i64, scratch_operands = 0 : i64, tpu.core_type = #tpu.core_type<tc>, window_params = [{transform_indices = @transform_0, window_bounds = array<i64: 256, 16>}, {transform_indices = @transform_1, window_bounds = array<i64: 256, 16>}, {pipeline_mode = #tpu.pipeline_mode<synchronous>, transform_indices = @transform_2, window_bounds = array<i64: 16, 128>}, {pipeline_mode = #tpu.pipeline_mode<synchronous>, transform_indices = @transform_3, window_bounds = array<i64: 16, 128>}, {pipeline_mode = #tpu.pipeline_mode<synchronous>, transform_indices = @transform_4, window_bounds = array<i64: 1, 128>}, {pipeline_mode = #tpu.pipeline_mode<synchronous>, transform_indices = @transform_5, window_bounds = array<i64: 128, 128>}, {pipeline_mode = #tpu.pipeline_mode<synchronous>, transform_indices = @transform_6, window_bounds = array<i64: 1, 128>}, {pipeline_mode = #tpu.pipeline_mode<synchronous>, transform_indices = @transform_7, window_bounds = array<i64: 128, 128>}, {pipeline_mode = #tpu.pipeline_mode<synchronous>, transform_indices = @transform_8, window_bounds = array<i64: 1, 128>}, {transform_indices = @transform_9, window_bounds = array<i64: 256, 128>}]} {
    %c0 = arith.constant 0 : index
    %c0_0 = arith.constant 0 : index
    %0 = vector.load %arg1[%c0, %c0_0] : memref<256x16xbf16, #tpu.memory_space<vmem>>, vector<256x16xbf16>
    %c0_1 = arith.constant 0 : index
    %c0_2 = arith.constant 0 : index
    %1 = vector.load %arg2[%c0_1, %c0_2] : memref<256x16xbf16, #tpu.memory_space<vmem>>, vector<256x16xbf16>
    %c0_3 = arith.constant 0 : index
    %c0_4 = arith.constant 0 : index
    %2 = vector.load %arg3[%c0_3, %c0_4] : memref<16x128xbf16, #tpu.memory_space<vmem>>, vector<16x128xbf16>
    %cst = arith.constant dense<0.000000e+00> : vector<256x128xf32>
    %3 = tpu.matmul %0, %2, %cst {dimension_numbers = #tpu.dot_dimension_numbers<[1], [0], [0], [1], [0, 0, 1, 1], [], []>} : vector<256x16xbf16>, vector<16x128xbf16>, vector<256x128xf32> -> vector<256x128xf32>
    %c0_5 = arith.constant 0 : index
    %c0_6 = arith.constant 0 : index
    %4 = vector.load %arg4[%c0_5, %c0_6] : memref<16x128xbf16, #tpu.memory_space<vmem>>, vector<16x128xbf16>
    %cst_7 = arith.constant dense<0.000000e+00> : vector<256x128xf32>
    %5 = tpu.matmul %1, %4, %cst_7 {dimension_numbers = #tpu.dot_dimension_numbers<[1], [0], [0], [1], [0, 0, 1, 1], [], []>} : vector<256x16xbf16>, vector<16x128xbf16>, vector<256x128xf32> -> vector<256x128xf32>
    %6 = arith.addf %3, %5 : vector<256x128xf32>
    %c0_8 = arith.constant 0 : index
    %c0_9 = arith.constant 0 : index
    %7 = vector.load %arg5[%c0_8, %c0_9] : memref<1x128xf32, #tpu.memory_space<vmem>>, vector<1x128xf32>
    %8 = vector.broadcast %7 : vector<1x128xf32> to vector<256x128xf32>
    %9 = arith.addf %6, %8 : vector<256x128xf32>
    %cst_10 = arith.constant 0.000000e+00 : f32
    %10 = vector.broadcast %cst_10 : f32 to vector<256x128xf32>
    %11 = arith.maximumf %9, %10 : vector<256x128xf32>
    %12 = arith.truncf %11 : vector<256x128xf32> to vector<256x128xbf16>
    %c0_11 = arith.constant 0 : index
    %c0_12 = arith.constant 0 : index
    %13 = vector.load %arg6[%c0_11, %c0_12] : memref<128x128xbf16, #tpu.memory_space<vmem>>, vector<128x128xbf16>
    %cst_13 = arith.constant dense<0.000000e+00> : vector<256x128xf32>
    %14 = tpu.matmul %12, %13, %cst_13 {dimension_numbers = #tpu.dot_dimension_numbers<[1], [0], [0], [1], [0, 0, 1, 1], [], []>} : vector<256x128xbf16>, vector<128x128xbf16>, vector<256x128xf32> -> vector<256x128xf32>
    %c0_14 = arith.constant 0 : index
    %c0_15 = arith.constant 0 : index
    %15 = vector.load %arg7[%c0_14, %c0_15] : memref<1x128xf32, #tpu.memory_space<vmem>>, vector<1x128xf32>
    %16 = vector.broadcast %15 : vector<1x128xf32> to vector<256x128xf32>
    %17 = arith.addf %14, %16 : vector<256x128xf32>
    %cst_16 = arith.constant 0.000000e+00 : f32
    %18 = vector.broadcast %cst_16 : f32 to vector<256x128xf32>
    %19 = arith.maximumf %17, %18 : vector<256x128xf32>
    %20 = arith.truncf %19 : vector<256x128xf32> to vector<256x128xbf16>
    %c0_17 = arith.constant 0 : index
    %c0_18 = arith.constant 0 : index
    %21 = vector.load %arg8[%c0_17, %c0_18] : memref<128x128xbf16, #tpu.memory_space<vmem>>, vector<128x128xbf16>
    %cst_19 = arith.constant dense<0.000000e+00> : vector<256x128xf32>
    %22 = tpu.matmul %20, %21, %cst_19 {dimension_numbers = #tpu.dot_dimension_numbers<[1], [0], [0], [1], [0, 0, 1, 1], [], []>} : vector<256x128xbf16>, vector<128x128xbf16>, vector<256x128xf32> -> vector<256x128xf32>
    %c0_20 = arith.constant 0 : index
    %c0_21 = arith.constant 0 : index
    %23 = vector.load %arg9[%c0_20, %c0_21] : memref<1x128xf32, #tpu.memory_space<vmem>>, vector<1x128xf32>
    %24 = vector.broadcast %23 : vector<1x128xf32> to vector<256x128xf32>
    %25 = arith.addf %22, %24 : vector<256x128xf32>
    %26 = arith.negf %25 : vector<256x128xf32>
    %27 = math.exp %26 : vector<256x128xf32>
    %cst_22 = arith.constant 1.000000e+00 : f32
    %28 = vector.broadcast %cst_22 : f32 to vector<256x128xf32>
    %29 = arith.addf %28, %27 : vector<256x128xf32>
    %30 = arith.divf %28, %29 : vector<256x128xf32>
    %c0_23 = arith.constant 0 : index
    %c0_24 = arith.constant 0 : index
    %31 = vector.load %arg10[%c0_23, %c0_24] : memref<256x128xf32, #tpu.memory_space<vmem>>, vector<256x128xf32>
    tpu.vector_store %arg10[%c0_23, %c0_24], %30 {strides = array<i32>} : memref<256x128xf32, #tpu.memory_space<vmem>>, vector<256x128xf32>,
    return
  }
  func.func @transform_0(%arg0: i32) -> (i32, i32) {
    %c0_i32 = arith.constant 0 : i32
    %c0_i32_0 = arith.constant 0 : i32
    return %arg0, %c0_i32 : i32, i32
  }
  func.func @transform_1(%arg0: i32) -> (i32, i32) {
    %c0_i32 = arith.constant 0 : i32
    %c0_i32_0 = arith.constant 0 : i32
    return %arg0, %c0_i32 : i32, i32
  }
  func.func @transform_2(%arg0: i32) -> (i32, i32) {
    %c0_i32 = arith.constant 0 : i32
    %c0_i32_0 = arith.constant 0 : i32
    %c0_i32_1 = arith.constant 0 : i32
    return %c0_i32, %c0_i32_0 : i32, i32
  }
  func.func @transform_3(%arg0: i32) -> (i32, i32) {
    %c0_i32 = arith.constant 0 : i32
    %c0_i32_0 = arith.constant 0 : i32
    %c0_i32_1 = arith.constant 0 : i32
    return %c0_i32, %c0_i32_0 : i32, i32
  }
  func.func @transform_4(%arg0: i32) -> (i32, i32) {
    %c0_i32 = arith.constant 0 : i32
    %c0_i32_0 = arith.constant 0 : i32
    %c0_i32_1 = arith.constant 0 : i32
    return %c0_i32, %c0_i32_0 : i32, i32
  }
  func.func @transform_5(%arg0: i32) -> (i32, i32) {
    %c0_i32 = arith.constant 0 : i32
    %c0_i32_0 = arith.constant 0 : i32
    %c0_i32_1 = arith.constant 0 : i32
    return %c0_i32, %c0_i32_0 : i32, i32
  }
  func.func @transform_6(%arg0: i32) -> (i32, i32) {
    %c0_i32 = arith.constant 0 : i32
    %c0_i32_0 = arith.constant 0 : i32
    %c0_i32_1 = arith.constant 0 : i32
    return %c0_i32, %c0_i32_0 : i32, i32
  }
  func.func @transform_7(%arg0: i32) -> (i32, i32) {
    %c0_i32 = arith.constant 0 : i32
    %c0_i32_0 = arith.constant 0 : i32
    %c0_i32_1 = arith.constant 0 : i32
    return %c0_i32, %c0_i32_0 : i32, i32
  }
  func.func @transform_8(%arg0: i32) -> (i32, i32) {
    %c0_i32 = arith.constant 0 : i32
    %c0_i32_0 = arith.constant 0 : i32
    %c0_i32_1 = arith.constant 0 : i32
    return %c0_i32, %c0_i32_0 : i32, i32
  }
  func.func @transform_9(%arg0: i32) -> (i32, i32) {
    %c0_i32 = arith.constant 0 : i32
    %c0_i32_0 = arith.constant 0 : i32
    return %arg0, %c0_i32 : i32, i32
  }
}

</mosaic_0001>

<llo_original>
// kernel: _lambda_.1
$region0: #{_lambda_.1}
  #allocation0 [shape = 'u32[]', space=smem, size = 0x4, offset = 0x4, fixed_abs, tag = 'smem constant byte address 0x4 - core index']
  #allocation1 [shape = 'u32[144,128]{1,0:T(1,128)}', space=vmem, size = 0x12000, scoped, tag = 'internal scratch']
  %s0 = inlined_call_operand.vmem [shape: bf16[512,16], index: 0, kind: input, shape index: {}]
  %s1 = inlined_call_operand.vmem [shape: bf16[512,16], index: 1, kind: input, shape index: {}]
  %s2 = inlined_call_operand.vmem [shape: bf16[16,128], index: 2, kind: input, shape index: {}]
  %s3 = inlined_call_operand.vmem [shape: bf16[16,128], index: 3, kind: input, shape index: {}]
  %s4 = inlined_call_operand.vmem [shape: f32[1,128], index: 4, kind: input, shape index: {}]
  %s5 = inlined_call_operand.vmem [shape: bf16[128,128], index: 5, kind: input, shape index: {}]
  %s6 = inlined_call_operand.vmem [shape: f32[1,128], index: 6, kind: input, shape index: {}]
  %s7 = inlined_call_operand.vmem [shape: bf16[128,128], index: 7, kind: input, shape index: {}]
  %s8 = inlined_call_operand.vmem [shape: f32[1,128], index: 8, kind: input, shape index: {}]
  %s9 = inlined_call_operand.vmem [shape: f32[512,128], index: 9, kind: output, shape index: {}]
  %s10 = sld [smem:[#allocation0]]
  $region69: #{_lambda_.1} parent=0
    _
  %s12 = ssub.s32 1, %s10
  %s13 = scalar_select 0, %s12, %s10
  loop: start=0, step=1, limit=4
  $region2: #{_lambda_.1} parent=0 // loop_pre_header
    _
  $region3: #{_lambda_.1} parent=0 // loop_header
    %s15 = sphi 0, %s19
    %p16 = scmp.ge.s32.totalorder %s15, 4
    %s25 = sphi 0, %s27
    %s28 = sphi 0, %s25
    %s29 = sphi 0, %s28
    %s45 = sphi 0, %s29
    %s51 = sphi 0, %s53
    %s54 = sphi 0, %s51
    %s55 = sphi 0, %s54
    %s71 = sphi 0, %s55
    %s75 = sphi 0, %s75
    %s77 = sphi 0, %s75
    %s78 = sphi 0, %s77
    %s92 = sphi 0, %s78
    %s96 = sphi 0, %s96
    %s98 = sphi 0, %s96
    %s99 = sphi 0, %s98
    %s113 = sphi 0, %s99
    %s117 = sphi 0, %s117
    %s119 = sphi 0, %s117
    %s120 = sphi 0, %s119
    %s134 = sphi 0, %s120
    %s138 = sphi 0, %s138
    %s140 = sphi 0, %s138
    %s141 = sphi 0, %s140
    %s155 = sphi 0, %s141
    %s159 = sphi 0, %s159
    %s161 = sphi 0, %s159
    %s162 = sphi 0, %s161
    %s176 = sphi 0, %s162
    %s180 = sphi 0, %s180
    %s182 = sphi 0, %s180
    %s183 = sphi 0, %s182
    %s197 = sphi 0, %s183
    %s201 = sphi 0, %s201
    %s203 = sphi 0, %s201
    %s204 = sphi 0, %s203
    %s218 = sphi 0, %s204
    %s224 = sphi 0, %s226
    %s227 = sphi 0, %s224
    %s228 = sphi 0, %s227
    %s244 = sphi 0, %s228
  $region4: #{_lambda_.1} parent=0 // loop_header_branch
    %18 = sbr.rel (%p16) target = $region8
  $region5: #{_lambda_.1} parent=0 // loop_body
    %s20 = ssub.s32 %s15, 1
    %s21 = ssub.s32 %s15, 2
    %s22 = sadd.s32 %s15, 1
    %s23 = ssub.s32 %s15, %s22
    %p24 = scmp.eq.s32.totalorder %s23, 0
    %s26 = sadd.s32 %s25, 1
    %s27 = scalar_select %p24, %s25, %s26
    %p30 = pneg %p24
    %p31 = scmp.eq.s32.totalorder %s15, 1
    %p32 = por %p30, %p31
    %p33 = scmp.ne.s32.totalorder %s25, %s28
    %p34 = scmp.eq.s32.totalorder %s15, 0
    %p35 = por %p33, %p34
    %p36 = scmp.ne.s32.totalorder %s25, %s28
    %p37 = scmp.eq.s32.totalorder %s20, 1
    %p38 = por %p36, %p37
    %p39 = scmp.ne.s32.totalorder %s28, %s29
    %p40 = scmp.eq.s32.totalorder %s20, 0
    %p41 = por %p39, %p40
    %p42 = scmp.ne.s32.totalorder %s28, %s29
    %p43 = scmp.eq.s32.totalorder %s21, 1
    %p44 = por %p42, %p43
    %p46 = scmp.ne.s32.totalorder %s29, %s45
    %p47 = scmp.eq.s32.totalorder %s21, 0
    %p48 = por %p46, %p47
    %s49 = ssub.s32 %s15, %s22
    %p50 = scmp.eq.s32.totalorder %s49, 0
    %s52 = sadd.s32 %s51, 1
    %s53 = scalar_select %p50, %s51, %s52
    %p56 = pneg %p50
    %p57 = scmp.eq.s32.totalorder %s15, 1
    %p58 = por %p56, %p57
    %p59 = scmp.ne.s32.totalorder %s51, %s54
    %p60 = scmp.eq.s32.totalorder %s15, 0
    %p61 = por %p59, %p60
    %p62 = scmp.ne.s32.totalorder %s51, %s54
    %p63 = scmp.eq.s32.totalorder %s20, 1
    %p64 = por %p62, %p63
    %p65 = scmp.ne.s32.totalorder %s54, %s55
    %p66 = scmp.eq.s32.totalorder %s20, 0
    %p67 = por %p65, %p66
    %p68 = scmp.ne.s32.totalorder %s54, %s55
    %p69 = scmp.eq.s32.totalorder %s21, 1
    %p70 = por %p68, %p69
    %p72 = scmp.ne.s32.totalorder %s55, %s71
    %p73 = scmp.eq.s32.totalorder %s21, 0
    %p74 = por %p72, %p73
    %s76 = sadd.s32 %s75, 1
    %p79 = scmp.eq.s32.totalorder %s15, 1
    %p80 = scmp.ne.s32.totalorder %s75, %s77
    %p81 = scmp.eq.s32.totalorder %s15, 0
    %p82 = por %p80, %p81
    %p83 = scmp.ne.s32.totalorder %s75, %s77
    %p84 = scmp.eq.s32.totalorder %s20, 1
    %p85 = por %p83, %p84
    %p86 = scmp.ne.s32.totalorder %s77, %s78
    %p87 = scmp.eq.s32.totalorder %s20, 0
    %p88 = por %p86, %p87
    %p89 = scmp.ne.s32.totalorder %s77, %s78
    %p90 = scmp.eq.s32.totalorder %s21, 1
    %p91 = por %p89, %p90
    %p93 = scmp.ne.s32.totalorder %s78, %s92
    %p94 = scmp.eq.s32.totalorder %s21, 0
    %p95 = por %p93, %p94
    %s97 = sadd.s32 %s96, 1
    %p100 = scmp.eq.s32.totalorder %s15, 1
    %p101 = scmp.ne.s32.totalorder %s96, %s98
    %p102 = scmp.eq.s32.totalorder %s15, 0
    %p103 = por %p101, %p102
    %p104 = scmp.ne.s32.totalorder %s96, %s98
    %p105 = scmp.eq.s32.totalorder %s20, 1
    %p106 = por %p104, %p105
    %p107 = scmp.ne.s32.totalorder %s98, %s99
    %p108 = scmp.eq.s32.totalorder %s20, 0
    %p109 = por %p107, %p108
    %p110 = scmp.ne.s32.totalorder %s98, %s99
    %p111 = scmp.eq.s32.totalorder %s21, 1
    %p112 = por %p110, %p111
    %p114 = scmp.ne.s32.totalorder %s99, %s113
    %p115 = scmp.eq.s32.totalorder %s21, 0
    %p116 = por %p114, %p115
    %s118 = sadd.s32 %s117, 1
    %p121 = scmp.eq.s32.totalorder %s15, 1
    %p122 = scmp.ne.s32.totalorder %s117, %s119
    %p123 = scmp.eq.s32.totalorder %s15, 0
    %p124 = por %p122, %p123
    %p125 = scmp.ne.s32.totalorder %s117, %s119
    %p126 = scmp.eq.s32.totalorder %s20, 1
    %p127 = por %p125, %p126
    %p128 = scmp.ne.s32.totalorder %s119, %s120
    %p129 = scmp.eq.s32.totalorder %s20, 0
    %p130 = por %p128, %p129
    %p131 = scmp.ne.s32.totalorder %s119, %s120
    %p132 = scmp.eq.s32.totalorder %s21, 1
    %p133 = por %p131, %p132
    %p135 = scmp.ne.s32.totalorder %s120, %s134
    %p136 = scmp.eq.s32.totalorder %s21, 0
    %p137 = por %p135, %p136
    %s139 = sadd.s32 %s138, 1
    %p142 = scmp.eq.s32.totalorder %s15, 1
    %p143 = scmp.ne.s32.totalorder %s138, %s140
    %p144 = scmp.eq.s32.totalorder %s15, 0
    %p145 = por %p143, %p144
    %p146 = scmp.ne.s32.totalorder %s138, %s140
    %p147 = scmp.eq.s32.totalorder %s20, 1
    %p148 = por %p146, %p147
    %p149 = scmp.ne.s32.totalorder %s140, %s141
    %p150 = scmp.eq.s32.totalorder %s20, 0
    %p151 = por %p149, %p150
    %p152 = scmp.ne.s32.totalorder %s140, %s141
    %p153 = scmp.eq.s32.totalorder %s21, 1
    %p154 = por %p152, %p153
    %p156 = scmp.ne.s32.totalorder %s141, %s155
    %p157 = scmp.eq.s32.totalorder %s21, 0
    %p158 = por %p156, %p157
    %s160 = sadd.s32 %s159, 1
    %p163 = scmp.eq.s32.totalorder %s15, 1
    %p164 = scmp.ne.s32.totalorder %s159, %s161
    %p165 = scmp.eq.s32.totalorder %s15, 0
    %p166 = por %p164, %p165
    %p167 = scmp.ne.s32.totalorder %s159, %s161
    %p168 = scmp.eq.s32.totalorder %s20, 1
    %p169 = por %p167, %p168
    %p170 = scmp.ne.s32.totalorder %s161, %s162
    %p171 = scmp.eq.s32.totalorder %s20, 0
    %p172 = por %p170, %p171
    %p173 = scmp.ne.s32.totalorder %s161, %s162
    %p174 = scmp.eq.s32.totalorder %s21, 1
    %p175 = por %p173, %p174
    %p177 = scmp.ne.s32.totalorder %s162, %s176
    %p178 = scmp.eq.s32.totalorder %s21, 0
    %p179 = por %p177, %p178
    %s181 = sadd.s32 %s180, 1
    %p184 = scmp.eq.s32.totalorder %s15, 1
    %p185 = scmp.ne.s32.totalorder %s180, %s182
    %p186 = scmp.eq.s32.totalorder %s15, 0
    %p187 = por %p185, %p186
    %p188 = scmp.ne.s32.totalorder %s180, %s182
    %p189 = scmp.eq.s32.totalorder %s20, 1
    %p190 = por %p188, %p189
    %p191 = scmp.ne.s32.totalorder %s182, %s183
    %p192 = scmp.eq.s32.totalorder %s20, 0
    %p193 = por %p191, %p192
    %p194 = scmp.ne.s32.totalorder %s182, %s183
    %p195 = scmp.eq.s32.totalorder %s21, 1
    %p196 = por %p194, %p195
    %p198 = scmp.ne.s32.totalorder %s183, %s197
    %p199 = scmp.eq.s32.totalorder %s21, 0
    %p200 = por %p198, %p199
    %s202 = sadd.s32 %s201, 1
    %p205 = scmp.eq.s32.totalorder %s15, 1
    %p206 = scmp.ne.s32.totalorder %s201, %s203
    %p207 = scmp.eq.s32.totalorder %s15, 0
    %p208 = por %p206, %p207
    %p209 = scmp.ne.s32.totalorder %s201, %s203
    %p210 = scmp.eq.s32.totalorder %s20, 1
    %p211 = por %p209, %p210
    %p212 = scmp.ne.s32.totalorder %s203, %s204
    %p213 = scmp.eq.s32.totalorder %s20, 0
    %p214 = por %p212, %p213
    %p215 = scmp.ne.s32.totalorder %s203, %s204
    %p216 = scmp.eq.s32.totalorder %s21, 1
    %p217 = por %p215, %p216
    %p219 = scmp.ne.s32.totalorder %s204, %s218
    %p220 = scmp.eq.s32.totalorder %s21, 0
    %p221 = por %p219, %p220
    %s222 = ssub.s32 %s15, %s22
    %p223 = scmp.eq.s32.totalorder %s222, 0
    %s225 = sadd.s32 %s224, 1
    %s226 = scalar_select %p223, %s224, %s225
    %p229 = pneg %p223
    %p230 = scmp.eq.s32.totalorder %s15, 1
    %p231 = por %p229, %p230
    %p232 = scmp.ne.s32.totalorder %s224, %s227
    %p233 = scmp.eq.s32.totalorder %s15, 0
    %p234 = por %p232, %p233
    %p235 = scmp.ne.s32.totalorder %s224, %s227
    %p236 = scmp.eq.s32.totalorder %s20, 1
    %p237 = por %p235, %p236
    %p238 = scmp.ne.s32.totalorder %s227, %s228
    %p239 = scmp.eq.s32.totalorder %s20, 0
    %p240 = por %p238, %p239
    %p241 = scmp.ne.s32.totalorder %s227, %s228
    %p242 = scmp.eq.s32.totalorder %s21, 1
    %p243 = por %p241, %p242
    %p245 = scmp.ne.s32.totalorder %s228, %s244
    %p246 = scmp.eq.s32.totalorder %s21, 0
    %p247 = por %p245, %p246
    %p248 = scmp.le.s32.totalorder 1, %s15
    %p249 = scmp.lt.s32.totalorder %s15, 3
    %p250 = pnand %p248, %p249
    %p251 = pneg %p250
    // Predicated region
    $region9: #{_lambda_.1} parent=5 // pred_check
      _
    $region10: #{_lambda_.1} parent=5 // pred_check_branch
      %253 = sbr.rel (%p250) target = $region12
    $region11: #{_lambda_.1} parent=5 // pred_region
      %s254 = ssub.s32 %s15, 1
      // Predicated region
      $region13: #{_lambda_.1} parent=11 // pred_check
        %p255 = pneg %p88
      $region14: #{_lambda_.1} parent=11 // pred_check_branch
        %257 = sbr.rel (%p255) target = $region16
      $region15: #{_lambda_.1} parent=11 // pred_region
        _
      $region16: #{_lambda_.1} parent=11 // pred_fallthru
        _
      // Predicated region
      $region17: #{_lambda_.1} parent=11 // pred_check
        %p258 = pneg %p109
      $region18: #{_lambda_.1} parent=11 // pred_check_branch
        %260 = sbr.rel (%p258) target = $region20
      $region19: #{_lambda_.1} parent=11 // pred_region
        _
      $region20: #{_lambda_.1} parent=11 // pred_fallthru
        _
      // Predicated region
      $region21: #{_lambda_.1} parent=11 // pred_check
        %p261 = pneg %p130
      $region22: #{_lambda_.1} parent=11 // pred_check_branch
        %263 = sbr.rel (%p261) target = $region24
      $region23: #{_lambda_.1} parent=11 // pred_region
        _
      $region24: #{_lambda_.1} parent=11 // pred_fallthru
        _
      // Predicated region
      $region25: #{_lambda_.1} parent=11 // pred_check
        %p264 = pneg %p151
      $region26: #{_lambda_.1} parent=11 // pred_check_branch
        %266 = sbr.rel (%p264) target = $region28
      $region27: #{_lambda_.1} parent=11 // pred_region
        _
      $region28: #{_lambda_.1} parent=11 // pred_fallthru
        _
      // Predicated region
      $region29: #{_lambda_.1} parent=11 // pred_check
        %p267 = pneg %p172
      $region30: #{_lambda_.1} parent=11 // pred_check_branch
        %269 = sbr.rel (%p267) target = $region32
      $region31: #{_lambda_.1} parent=11 // pred_region
        _
      $region32: #{_lambda_.1} parent=11 // pred_fallthru
        _
      // Predicated region
      $region33: #{_lambda_.1} parent=11 // pred_check
        %p270 = pneg %p193
      $region34: #{_lambda_.1} parent=11 // pred_check_branch
        %272 = sbr.rel (%p270) target = $region36
      $region35: #{_lambda_.1} parent=11 // pred_region
        _
      $region36: #{_lambda_.1} parent=11 // pred_fallthru
        _
      // Predicated region
      $region37: #{_lambda_.1} parent=11 // pred_check
        %p273 = pneg %p214
      $region38: #{_lambda_.1} parent=11 // pred_check_branch
        %275 = sbr.rel (%p273) target = $region40
      $region39: #{_lambda_.1} parent=11 // pred_region
        _
      $region40: #{_lambda_.1} parent=11 // pred_fallthru
        _
    $region12: #{_lambda_.1} parent=5 // pred_fallthru
      _
    %p276 = scmp.lt.s32.totalorder %s15, 2
    // Predicated region
    $region41: #{_lambda_.1} parent=5 // pred_check
      %p277 = pneg %p276
    $region42: #{_lambda_.1} parent=5 // pred_check_branch
      %279 = sbr.rel (%p277) target = $region44
    $region43: #{_lambda_.1} parent=5 // pred_region
      // Predicated region
      $region45: #{_lambda_.1} parent=43 // pred_check
        %p280 = pneg %p35
      $region46: #{_lambda_.1} parent=43 // pred_check_branch
        %282 = sbr.rel (%p280) target = $region48
      $region47: #{_lambda_.1} parent=43 // pred_region
        %s283 = smul.u32 32, %s15
        %p284 = scmp.lt.s32.totalorder %s283, 63
        %s285 = scalar_select %p284, %s283, 63
        %s286 = smul.addr %s285, 4
        %s287 = scalar_lea.vmem %s0, %s286
        %s288 = smul.u32 32, %s15
      $region48: #{_lambda_.1} parent=43 // pred_fallthru
        _
      // Predicated region
      $region49: #{_lambda_.1} parent=43 // pred_check
        %p289 = pneg %p61
      $region50: #{_lambda_.1} parent=43 // pred_check_branch
        %291 = sbr.rel (%p289) target = $region52
      $region51: #{_lambda_.1} parent=43 // pred_region
        %s292 = smul.u32 32, %s15
        %p293 = scmp.lt.s32.totalorder %s292, 63
        %s294 = scalar_select %p293, %s292, 63
        %s295 = smul.addr %s294, 4
        %s296 = scalar_lea.vmem %s1, %s295
        %s297 = smul.u32 32, %s15
      $region52: #{_lambda_.1} parent=43 // pred_fallthru
        _
    $region44: #{_lambda_.1} parent=5 // pred_fallthru
      _
    %p298 = scmp.le.s32.totalorder 1, %s15
    %p299 = scmp.lt.s32.totalorder %s15, 3
    %p300 = pnand %p298, %p299
    %p301 = pneg %p300
    // Predicated region
    $region53: #{_lambda_.1} parent=5 // pred_check
      _
    $region54: #{_lambda_.1} parent=5 // pred_check_branch
      %303 = sbr.rel (%p300) target = $region56
    $region55: #{_lambda_.1} parent=5 // pred_region
      %s304 = ssub.s32 %s15, 1
      %s305 = smul.u32 32, %s20
      %p306 = scmp.lt.s32.totalorder %s305, 63
      %s307 = scalar_select %p306, %s305, 63
      %s308 = smul.addr %s307, 4
      %s309 = scalar_lea.vmem %s0, %s308
      %p310 = pneg %p41
      %p311 = pneg %p38
      %s312 = smul.u32 32, %s20
      %p313 = scmp.lt.s32.totalorder %s312, 63
      %s314 = scalar_select %p313, %s312, 63
      %s315 = smul.addr %s314, 4
      %s316 = scalar_lea.vmem %s1, %s315
      %p317 = pneg %p67
      %p318 = pneg %p64
      %p319 = pneg %p88
      %p320 = pneg %p85
      %p321 = pneg %p109
      %p322 = pneg %p106
      %p323 = pneg %p130
      %p324 = pneg %p127
      %p325 = pneg %p151
      %p326 = pneg %p148
      %p327 = pneg %p172
      %p328 = pneg %p169
      %p329 = pneg %p193
      %p330 = pneg %p190
      %p331 = pneg %p214
      %p332 = pneg %p211
      %p333 = pneg %p240
      %p334 = pneg %p237
      %s335 = smul.u32 32, %s20
      %p336 = scmp.lt.s32.totalorder %s335, 63
      %s337 = scalar_select %p336, %s335, 63
      %s338 = smul.addr %s337, 8
      %s339 = scalar_lea.vmem %s9, %s338
      %s340 = smul.u32 32, %s20
      %p341 = scmp.lt.s32.totalorder %s340, 63
      %s342 = scalar_select %p341, %s340, 63
      %s343 = smul.addr %s342, 4
      %s344 = scalar_lea.vmem %s0, %s343
      %s345 = smul.u32 32, %s20
      %s346 = smul.u32 32, %s20
      %p347 = scmp.lt.s32.totalorder %s346, 63
      %s348 = scalar_select %p347, %s346, 63
      %s349 = smul.addr %s348, 4
      %s350 = scalar_lea.vmem %s1, %s349
      %s351 = smul.u32 32, %s20
      %s352 = smul.u32 32, %s20
      %p353 = scmp.lt.s32.totalorder %s352, 63
      %s354 = scalar_select %p353, %s352, 63
      %s355 = smul.addr %s354, 8
      %s356 = scalar_lea.vmem %s9, %s355
      %s357 = smul.u32 32, %s20
      %v359 = vld [vmem:[%s344] sm:$0xf]
      %v360 = vld [vmem:[%s344 + $0x4] sm:$0xf]
      %v361 = vld [vmem:[%s344 + $0x8] sm:$0xf]
      %v362 = vld [vmem:[%s344 + $0xc] sm:$0xf]
      %v363 = vld [vmem:[%s344 + $0x10] sm:$0xf]
      %v364 = vld [vmem:[%s344 + $0x14] sm:$0xf]
      %v365 = vld [vmem:[%s344 + $0x18] sm:$0xf]
      %v366 = vld [vmem:[%s344 + $0x1c] sm:$0xf]
      %v367 = vld [vmem:[%s344 + $0x20] sm:$0xf]
      %v368 = vld [vmem:[%s344 + $0x24] sm:$0xf]
      %v369 = vld [vmem:[%s344 + $0x28] sm:$0xf]
      %v370 = vld [vmem:[%s344 + $0x2c] sm:$0xf]
      %v371 = vld [vmem:[%s344 + $0x30] sm:$0xf]
      %v372 = vld [vmem:[%s344 + $0x34] sm:$0xf]
      %v373 = vld [vmem:[%s344 + $0x38] sm:$0xf]
      %v374 = vld [vmem:[%s344 + $0x3c] sm:$0xf]
      %v375 = vld [vmem:[%s344 + $0x40] sm:$0xf]
      %v376 = vld [vmem:[%s344 + $0x44] sm:$0xf]
      %v377 = vld [vmem:[%s344 + $0x48] sm:$0xf]
      %v378 = vld [vmem:[%s344 + $0x4c] sm:$0xf]
      %v379 = vld [vmem:[%s344 + $0x50] sm:$0xf]
      %v380 = vld [vmem:[%s344 + $0x54] sm:$0xf]
      %v381 = vld [vmem:[%s344 + $0x58] sm:$0xf]
      %v382 = vld [vmem:[%s344 + $0x5c] sm:$0xf]
      %v383 = vld [vmem:[%s344 + $0x60] sm:$0xf]
      %v384 = vld [vmem:[%s344 + $0x64] sm:$0xf]
      %v385 = vld [vmem:[%s344 + $0x68] sm:$0xf]
      %v386 = vld [vmem:[%s344 + $0x6c] sm:$0xf]
      %v387 = vld [vmem:[%s344 + $0x70] sm:$0xf]
      %v388 = vld [vmem:[%s344 + $0x74] sm:$0xf]
      %v389 = vld [vmem:[%s344 + $0x78] sm:$0xf]
      %v390 = vld [vmem:[%s344 + $0x7c] sm:$0xf]
      %v391 = vld [vmem:[%s350] sm:$0xf]
      %v392 = vld [vmem:[%s350 + $0x4] sm:$0xf]
      %v393 = vld [vmem:[%s350 + $0x8] sm:$0xf]
      %v394 = vld [vmem:[%s350 + $0xc] sm:$0xf]
      %v395 = vld [vmem:[%s350 + $0x10] sm:$0xf]
      %v396 = vld [vmem:[%s350 + $0x14] sm:$0xf]
      %v397 = vld [vmem:[%s350 + $0x18] sm:$0xf]
      %v398 = vld [vmem:[%s350 + $0x1c] sm:$0xf]
      %v399 = vld [vmem:[%s350 + $0x20] sm:$0xf]
      %v400 = vld [vmem:[%s350 + $0x24] sm:$0xf]
      %v401 = vld [vmem:[%s350 + $0x28] sm:$0xf]
      %v402 = vld [vmem:[%s350 + $0x2c] sm:$0xf]
      %v403 = vld [vmem:[%s350 + $0x30] sm:$0xf]
      %v404 = vld [vmem:[%s350 + $0x34] sm:$0xf]
      %v405 = vld [vmem:[%s350 + $0x38] sm:$0xf]
      %v406 = vld [vmem:[%s350 + $0x3c] sm:$0xf]
      %v407 = vld [vmem:[%s350 + $0x40] sm:$0xf]
      %v408 = vld [vmem:[%s350 + $0x44] sm:$0xf]
      %v409 = vld [vmem:[%s350 + $0x48] sm:$0xf]
      %v410 = vld [vmem:[%s350 + $0x4c] sm:$0xf]
      %v411 = vld [vmem:[%s350 + $0x50] sm:$0xf]
      %v412 = vld [vmem:[%s350 + $0x54] sm:$0xf]
      %v413 = vld [vmem:[%s350 + $0x58] sm:$0xf]
      %v414 = vld [vmem:[%s350 + $0x5c] sm:$0xf]
      %v415 = vld [vmem:[%s350 + $0x60] sm:$0xf]
      %v416 = vld [vmem:[%s350 + $0x64] sm:$0xf]
      %v417 = vld [vmem:[%s350 + $0x68] sm:$0xf]
      %v418 = vld [vmem:[%s350 + $0x6c] sm:$0xf]
      %v419 = vld [vmem:[%s350 + $0x70] sm:$0xf]
      %v420 = vld [vmem:[%s350 + $0x74] sm:$0xf]
      %v421 = vld [vmem:[%s350 + $0x78] sm:$0xf]
      %v422 = vld [vmem:[%s350 + $0x7c] sm:$0xf]
      %v423 = vld [vmem:[%s2] sm:$0xf]
      %v424 = vld [vmem:[%s2 + $0x4] sm:$0xf]
      %v425 = vld [vmem:[%s3] sm:$0xf]
      %v426 = vld [vmem:[%s3 + $0x4] sm:$0xf]
      %v459 = vunpack.c.l.b16 %v391
      %v460 = vunpack.c.l.b16 %v392
      %v461 = vunpack.c.l.b16 %v393
      %v462 = vunpack.c.l.b16 %v394
      %v463 = vunpack.c.l.b16 %v395
      %v464 = vunpack.c.l.b16 %v396
      %v465 = vunpack.c.l.b16 %v397
      %v466 = vunpack.c.l.b16 %v398
      %v467 = vunpack.c.l.b16 %v399
      %v468 = vunpack.c.l.b16 %v400
      %v469 = vunpack.c.l.b16 %v401
      %v470 = vunpack.c.l.b16 %v402
      %v471 = vunpack.c.l.b16 %v403
      %v472 = vunpack.c.l.b16 %v404
      %v473 = vunpack.c.l.b16 %v405
      %v474 = vunpack.c.l.b16 %v406
      %v475 = vunpack.c.l.b16 %v407
      %v476 = vunpack.c.l.b16 %v408
      %v477 = vunpack.c.l.b16 %v409
      %v478 = vunpack.c.l.b16 %v410
      %v479 = vunpack.c.l.b16 %v411
      %v480 = vunpack.c.l.b16 %v412
      %v481 = vunpack.c.l.b16 %v413
      %v482 = vunpack.c.l.b16 %v414
      %v483 = vunpack.c.l.b16 %v415
      %v484 = vunpack.c.l.b16 %v416
      %v485 = vunpack.c.l.b16 %v417
      %v486 = vunpack.c.l.b16 %v418
      %v487 = vunpack.c.l.b16 %v419
      %v488 = vunpack.c.l.b16 %v420
      %v489 = vunpack.c.l.b16 %v421
      %v490 = vunpack.c.l.b16 %v422
      %v491 = vpack.c.b16 %v460, %v459
      %v492 = vpack.c.b16 %v462, %v461
      %v493 = vpack.c.b16 %v464, %v463
      %v494 = vpack.c.b16 %v466, %v465
      %v495 = vpack.c.b16 %v468, %v467
      %v496 = vpack.c.b16 %v470, %v469
      %v497 = vpack.c.b16 %v472, %v471
      %v498 = vpack.c.b16 %v474, %v473
      %v499 = vpack.c.b16 %v476, %v475
      %v500 = vpack.c.b16 %v478, %v477
      %v501 = vpack.c.b16 %v480, %v479
      %v502 = vpack.c.b16 %v482, %v481
      %v503 = vpack.c.b16 %v484, %v483
      %v504 = vpack.c.b16 %v486, %v485
      %v505 = vpack.c.b16 %v488, %v487
      %v506 = vpack.c.b16 %v490, %v489
      %v509 = vunpack.c.l.b16 %v425
      %v510 = vunpack.c.l.b16 %v426
      %v511 = vpack.c.b16 %v510, %v509
      %vm513 = vcmask 130048
      %v515 = vsel %vm513, %v491, 0
      %v518 = vsel %vm513, %v492, 0
      %v521 = vsel %vm513, %v493, 0
      %v524 = vsel %vm513, %v494, 0
      %v527 = vsel %vm513, %v495, 0
      %v530 = vsel %vm513, %v496, 0
      %v533 = vsel %vm513, %v497, 0
      %v536 = vsel %vm513, %v498, 0
      %v539 = vsel %vm513, %v499, 0
      %v542 = vsel %vm513, %v500, 0
      %v545 = vsel %vm513, %v501, 0
      %v548 = vsel %vm513, %v502, 0
      %v551 = vsel %vm513, %v503, 0
      %v554 = vsel %vm513, %v504, 0
      %v557 = vsel %vm513, %v505, 0
      %v560 = vsel %vm513, %v506, 0
      %562 = vmatprep.subr.bf16.mxu0 0
      %563 = vmatpush1.bf16.msra.mxu0 %v511
      %564 = vmatprep.subr.bf16.mxu0 0
      %565 = vmatpush1.bf16.msra.mxu0 0
      %566 = vmatprep.subr.bf16.mxu0 0
      %567 = vmatpush1.bf16.msra.mxu0 0
      %568 = vmatprep.subr.bf16.mxu0 0
      %569 = vmatpush1.bf16.msra.mxu0 0
      %570 = vmatprep.subr.bf16.mxu0 0
      %571 = vmatpush1.bf16.msra.mxu0 0
      %572 = vmatprep.subr.bf16.mxu0 0
      %573 = vmatpush1.bf16.msra.mxu0 0
      %574 = vmatprep.subr.bf16.mxu0 0
      %575 = vmatpush1.bf16.msra.mxu0 0
      %576 = vmatprep.subr.bf16.mxu0 0
      %577 = vmatpush1.bf16.msra.mxu0 0
      %578 = vmatprep.subr.bf16.mxu0 0
      %579 = vmatpush1.bf16.msra.mxu0 0
      %580 = vmatprep.subr.bf16.mxu0 0
      %581 = vmatpush1.bf16.msra.mxu0 0
      %582 = vmatprep.subr.bf16.mxu0 0
      %583 = vmatpush1.bf16.msra.mxu0 0
      %584 = vmatprep.subr.bf16.mxu0 0
      %585 = vmatpush1.bf16.msra.mxu0 0
      %586 = vmatprep.subr.bf16.mxu0 0
      %587 = vmatpush1.bf16.msra.mxu0 0
      %588 = vmatprep.subr.bf16.mxu0 0
      %589 = vmatpush1.bf16.msra.mxu0 0
      %590 = vmatprep.subr.bf16.mxu0 0
      %591 = vmatpush1.bf16.msra.mxu0 0
      %592 = vmatprep.subr.bf16.mxu0 0
      %593 = vmatpush1.bf16.msra.mxu0 0
      %594 = vmatprep.mubr.bf16.mxu0 0
      %595 = vmatmul.mubr.bf16.gmra.mrb[0].mxu0 %v515
      %v596 = vpop.f32.mrb[0].mxu0
      %v597 = vadd.f32 0.0, %v596
      %v598 = vpop.f32.mrb[0].mxu0
      %v599 = vpop.f32.mrb[0].mxu0
      %v600 = vadd.f32 0.0, %v599
      %v601 = vpop.f32.mrb[0].mxu0
      %602 = vmatprep.mubr.bf16.mxu0 0
      %603 = vmatmul.mubr.bf16.gmra.mrb[0].mxu0 %v518
      %v604 = vpop.f32.mrb[0].mxu0
      %v605 = vadd.f32 0.0, %v604
      %v606 = vpop.f32.mrb[0].mxu0
      %v607 = vpop.f32.mrb[0].mxu0
      %v608 = vadd.f32 0.0, %v607
      %v609 = vpop.f32.mrb[0].mxu0
      %610 = vmatprep.mubr.bf16.mxu0 0
      %611 = vmatmul.mubr.bf16.gmra.mrb[0].mxu0 %v521
      %v612 = vpop.f32.mrb[0].mxu0
      %v613 = vadd.f32 0.0, %v612
      %v614 = vpop.f32.mrb[0].mxu0
      %v615 = vpop.f32.mrb[0].mxu0
      %v616 = vadd.f32 0.0, %v615
      %v617 = vpop.f32.mrb[0].mxu0
      %618 = vmatprep.mubr.bf16.mxu0 0
      %619 = vmatmul.mubr.bf16.gmra.mrb[0].mxu0 %v524
      %v620 = vpop.f32.mrb[0].mxu0
      %v621 = vadd.f32 0.0, %v620
      %v622 = vpop.f32.mrb[0].mxu0
      %v623 = vpop.f32.mrb[0].mxu0
      %v624 = vadd.f32 0.0, %v623
      %v625 = vpop.f32.mrb[0].mxu0
      %626 = vmatprep.mubr.bf16.mxu0 0
      %627 = vmatmul.mubr.bf16.gmra.mrb[0].mxu0 %v527
      %v628 = vpop.f32.mrb[0].mxu0
      %v629 = vadd.f32 0.0, %v628
      %v630 = vpop.f32.mrb[0].mxu0
      %v631 = vpop.f32.mrb[0].mxu0
      %v632 = vadd.f32 0.0, %v631
      %v633 = vpop.f32.mrb[0].mxu0
      %634 = vmatprep.mubr.bf16.mxu0 0
      %635 = vmatmul.mubr.bf16.gmra.mrb[0].mxu0 %v530
      %v636 = vpop.f32.mrb[0].mxu0
      %v637 = vadd.f32 0.0, %v636
      %v638 = vpop.f32.mrb[0].mxu0
      %v639 = vpop.f32.mrb[0].mxu0
      %v640 = vadd.f32 0.0, %v639
      %v641 = vpop.f32.mrb[0].mxu0
      %642 = vmatprep.mubr.bf16.mxu0 0
      %643 = vmatmul.mubr.bf16.gmra.mrb[0].mxu0 %v533
      %v644 = vpop.f32.mrb[0].mxu0
      %v645 = vadd.f32 0.0, %v644
      %v646 = vpop.f32.mrb[0].mxu0
      %v647 = vpop.f32.mrb[0].mxu0
      %v648 = vadd.f32 0.0, %v647
      %v649 = vpop.f32.mrb[0].mxu0
      %650 = vmatprep.mubr.bf16.mxu0 0
      %651 = vmatmul.mubr.bf16.gmra.mrb[0].mxu0 %v536
      %v652 = vpop.f32.mrb[0].mxu0
      %v653 = vadd.f32 0.0, %v652
      %v654 = vpop.f32.mrb[0].mxu0
      %v655 = vpop.f32.mrb[0].mxu0
      %v656 = vadd.f32 0.0, %v655
      %v657 = vpop.f32.mrb[0].mxu0
      %658 = vmatprep.mubr.bf16.mxu0 0
      %659 = vmatmul.mubr.bf16.gmra.mrb[0].mxu0 %v539
      %v660 = vpop.f32.mrb[0].mxu0
      %v661 = vadd.f32 0.0, %v660
      %v662 = vpop.f32.mrb[0].mxu0
      %v663 = vpop.f32.mrb[0].mxu0
      %v664 = vadd.f32 0.0, %v663
      %v665 = vpop.f32.mrb[0].mxu0
      %666 = vmatprep.mubr.bf16.mxu0 0
      %667 = vmatmul.mubr.bf16.gmra.mrb[0].mxu0 %v542
      %v668 = vpop.f32.mrb[0].mxu0
      %v669 = vadd.f32 0.0, %v668
      %v670 = vpop.f32.mrb[0].mxu0
      %v671 = vpop.f32.mrb[0].mxu0
      %v672 = vadd.f32 0.0, %v671
      %v673 = vpop.f32.mrb[0].mxu0
      %674 = vmatprep.mubr.bf16.mxu0 0
      %675 = vmatmul.mubr.bf16.gmra.mrb[0].mxu0 %v545
      %v676 = vpop.f32.mrb[0].mxu0
      %v677 = vadd.f32 0.0, %v676
      %v678 = vpop.f32.mrb[0].mxu0
      %v679 = vpop.f32.mrb[0].mxu0
      %v680 = vadd.f32 0.0, %v679
      %v681 = vpop.f32.mrb[0].mxu0
      %682 = vmatprep.mubr.bf16.mxu0 0
      %683 = vmatmul.mubr.bf16.gmra.mrb[0].mxu0 %v548
      %v684 = vpop.f32.mrb[0].mxu0
      %v685 = vadd.f32 0.0, %v684
      %v686 = vpop.f32.mrb[0].mxu0
      %v687 = vpop.f32.mrb[0].mxu0
      %v688 = vadd.f32 0.0, %v687
      %v689 = vpop.f32.mrb[0].mxu0
      %690 = vmatprep.mubr.bf16.mxu0 0
      %691 = vmatmul.mubr.bf16.gmra.mrb[0].mxu0 %v551
      %v692 = vpop.f32.mrb[0].mxu0
      %v693 = vadd.f32 0.0, %v692
      %v694 = vpop.f32.mrb[0].mxu0
      %v695 = vpop.f32.mrb[0].mxu0
      %v696 = vadd.f32 0.0, %v695
      %v697 = vpop.f32.mrb[0].mxu0
      %698 = vmatprep.mubr.bf16.mxu0 0
      %699 = vmatmul.mubr.bf16.gmra.mrb[0].mxu0 %v554
      %v700 = vpop.f32.mrb[0].mxu0
      %v701 = vadd.f32 0.0, %v700
      %v702 = vpop.f32.mrb[0].mxu0
      %v703 = vpop.f32.mrb[0].mxu0
      %v704 = vadd.f32 0.0, %v703
      %v705 = vpop.f32.mrb[0].mxu0
      %706 = vmatprep.mubr.bf16.mxu0 0
      %707 = vmatmul.mubr.bf16.gmra.mrb[0].mxu0 %v557
      %v708 = vpop.f32.mrb[0].mxu0
      %v709 = vadd.f32 0.0, %v708
      %v710 = vpop.f32.mrb[0].mxu0
      %v711 = vpop.f32.mrb[0].mxu0
      %v712 = vadd.f32 0.0, %v711
      %v713 = vpop.f32.mrb[0].mxu0
      %714 = vmatprep.mubr.bf16.mxu0 0
      %715 = vmatmul.mubr.bf16.gmra.mrb[0].mxu0 %v560
      %v716 = vpop.f32.mrb[0].mxu0
      %v717 = vadd.f32 0.0, %v716
      %v718 = vpop.f32.mrb[0].mxu0
      %v719 = vpop.f32.mrb[0].mxu0
      %v720 = vadd.f32 0.0, %v719
      %v721 = vpop.f32.mrb[0].mxu0
      %722 = vdwg.mxu0
      %v755 = vunpack.c.l.b16 %v359
      %v756 = vunpack.c.l.b16 %v360
      %v757 = vunpack.c.l.b16 %v361
      %v758 = vunpack.c.l.b16 %v362
      %v759 = vunpack.c.l.b16 %v363
      %v760 = vunpack.c.l.b16 %v364
      %v761 = vunpack.c.l.b16 %v365
      %v762 = vunpack.c.l.b16 %v366
      %v763 = vunpack.c.l.b16 %v367
      %v764 = vunpack.c.l.b16 %v368
      %v765 = vunpack.c.l.b16 %v369
      %v766 = vunpack.c.l.b16 %v370
      %v767 = vunpack.c.l.b16 %v371
      %v768 = vunpack.c.l.b16 %v372
      %v769 = vunpack.c.l.b16 %v373
      %v770 = vunpack.c.l.b16 %v374
      %v771 = vunpack.c.l.b16 %v375
      %v772 = vunpack.c.l.b16 %v376
      %v773 = vunpack.c.l.b16 %v377
      %v774 = vunpack.c.l.b16 %v378
      %v775 = vunpack.c.l.b16 %v379
      %v776 = vunpack.c.l.b16 %v380
      %v777 = vunpack.c.l.b16 %v381
      %v778 = vunpack.c.l.b16 %v382
      %v779 = vunpack.c.l.b16 %v383
      %v780 = vunpack.c.l.b16 %v384
      %v781 = vunpack.c.l.b16 %v385
      %v782 = vunpack.c.l.b16 %v386
      %v783 = vunpack.c.l.b16 %v387
      %v784 = vunpack.c.l.b16 %v388
      %v785 = vunpack.c.l.b16 %v389
      %v786 = vunpack.c.l.b16 %v390
      %v787 = vpack.c.b16 %v756, %v755
      %v788 = vpack.c.b16 %v758, %v757
      %v789 = vpack.c.b16 %v760, %v759
      %v790 = vpack.c.b16 %v762, %v761
      %v791 = vpack.c.b16 %v764, %v763
      %v792 = vpack.c.b16 %v766, %v765
      %v793 = vpack.c.b16 %v768, %v767
      %v794 = vpack.c.b16 %v770, %v769
      %v795 = vpack.c.b16 %v772, %v771
      %v796 = vpack.c.b16 %v774, %v773
      %v797 = vpack.c.b16 %v776, %v775
      %v798 = vpack.c.b16 %v778, %v777
      %v799 = vpack.c.b16 %v780, %v779
      %v800 = vpack.c.b16 %v782, %v781
      %v801 = vpack.c.b16 %v784, %v783
      %v802 = vpack.c.b16 %v786, %v785
      %v805 = vunpack.c.l.b16 %v423
      %v806 = vunpack.c.l.b16 %v424
      %v807 = vpack.c.b16 %v806, %v805
      %v810 = vsel %vm513, %v787, 0
      %v813 = vsel %vm513, %v788, 0
      %v816 = vsel %vm513, %v789, 0
      %v819 = vsel %vm513, %v790, 0
      %v822 = vsel %vm513, %v791, 0
      %v825 = vsel %vm513, %v792, 0
      %v828 = vsel %vm513, %v793, 0
      %v831 = vsel %vm513, %v794, 0
      %v834 = vsel %vm513, %v795, 0
      %v837 = vsel %vm513, %v796, 0
      %v840 = vsel %vm513, %v797, 0
      %v843 = vsel %vm513, %v798, 0
      %v846 = vsel %vm513, %v799, 0
      %v849 = vsel %vm513, %v800, 0
      %v852 = vsel %vm513, %v801, 0
      %v855 = vsel %vm513, %v802, 0
      %857 = vmatprep.subr.bf16.mxu0 0
      %858 = vmatpush1.bf16.msra.mxu0 %v807
      %859 = vmatprep.subr.bf16.mxu0 0
      %860 = vmatpush1.bf16.msra.mxu0 0
      %861 = vmatprep.subr.bf16.mxu0 0
      %862 = vmatpush1.bf16.msra.mxu0 0
      %863 = vmatprep.subr.bf16.mxu0 0
      %864 = vmatpush1.bf16.msra.mxu0 0
      %865 = vmatprep.subr.bf16.mxu0 0
      %866 = vmatpush1.bf16.msra.mxu0 0
      %867 = vmatprep.subr.bf16.mxu0 0
      %868 = vmatpush1.bf16.msra.mxu0 0
      %869 = vmatprep.subr.bf16.mxu0 0
      %870 = vmatpush1.bf16.msra.mxu0 0
      %871 = vmatprep.subr.bf16.mxu0 0
      %872 = vmatpush1.bf16.msra.mxu0 0
      %873 = vmatprep.subr.bf16.mxu0 0
      %874 = vmatpush1.bf16.msra.mxu0 0
      %875 = vmatprep.subr.bf16.mxu0 0
      %876 = vmatpush1.bf16.msra.mxu0 0
      %877 = vmatprep.subr.bf16.mxu0 0
      %878 = vmatpush1.bf16.msra.mxu0 0
      %879 = vmatprep.subr.bf16.mxu0 0
      %880 = vmatpush1.bf16.msra.mxu0 0
      %881 = vmatprep.subr.bf16.mxu0 0
      %882 = vmatpush1.bf16.msra.mxu0 0
      %883 = vmatprep.subr.bf16.mxu0 0
      %884 = vmatpush1.bf16.msra.mxu0 0
      %885 = vmatprep.subr.bf16.mxu0 0
      %886 = vmatpush1.bf16.msra.mxu0 0
      %887 = vmatprep.subr.bf16.mxu0 0
      %888 = vmatpush1.bf16.msra.mxu0 0
      %889 = vmatprep.mubr.bf16.mxu0 0
      %890 = vmatmul.mubr.bf16.gmra.mrb[0].mxu0 %v810
      %v891 = vpop.f32.mrb[0].mxu0
      %v892 = vadd.f32 %v597, %v891
      %v893 = vpop.f32.mrb[0].mxu0
      %v894 = vpop.f32.mrb[0].mxu0
      %v895 = vadd.f32 %v600, %v894
      %v896 = vpop.f32.mrb[0].mxu0
      %897 = vmatprep.mubr.bf16.mxu0 0
      %898 = vmatmul.mubr.bf16.gmra.mrb[0].mxu0 %v813
      %v899 = vpop.f32.mrb[0].mxu0
      %v900 = vadd.f32 %v605, %v899
      %v901 = vpop.f32.mrb[0].mxu0
      %v902 = vpop.f32.mrb[0].mxu0
      %v903 = vadd.f32 %v608, %v902
      %v904 = vpop.f32.mrb[0].mxu0
      %905 = vmatprep.mubr.bf16.mxu0 0
      %906 = vmatmul.mubr.bf16.gmra.mrb[0].mxu0 %v816
      %v907 = vpop.f32.mrb[0].mxu0
      %v908 = vadd.f32 %v613, %v907
      %v909 = vpop.f32.mrb[0].mxu0
      %v910 = vpop.f32.mrb[0].mxu0
      %v911 = vadd.f32 %v616, %v910
      %v912 = vpop.f32.mrb[0].mxu0
      %913 = vmatprep.mubr.bf16.mxu0 0
      %914 = vmatmul.mubr.bf16.gmra.mrb[0].mxu0 %v819
      %v915 = vpop.f32.mrb[0].mxu0
      %v916 = vadd.f32 %v621, %v915
      %v917 = vpop.f32.mrb[0].mxu0
      %v918 = vpop.f32.mrb[0].mxu0
      %v919 = vadd.f32 %v624, %v918
      %v920 = vpop.f32.mrb[0].mxu0
      %921 = vmatprep.mubr.bf16.mxu0 0
      %922 = vmatmul.mubr.bf16.gmra.mrb[0].mxu0 %v822
      %v923 = vpop.f32.mrb[0].mxu0
      %v924 = vadd.f32 %v629, %v923
      %v925 = vpop.f32.mrb[0].mxu0
      %v926 = vpop.f32.mrb[0].mxu0
      %v927 = vadd.f32 %v632, %v926
      %v928 = vpop.f32.mrb[0].mxu0
      %929 = vmatprep.mubr.bf16.mxu0 0
      %930 = vmatmul.mubr.bf16.gmra.mrb[0].mxu0 %v825
      %v931 = vpop.f32.mrb[0].mxu0
      %v932 = vadd.f32 %v637, %v931
      %v933 = vpop.f32.mrb[0].mxu0
      %v934 = vpop.f32.mrb[0].mxu0
      %v935 = vadd.f32 %v640, %v934
      %v936 = vpop.f32.mrb[0].mxu0
      %937 = vmatprep.mubr.bf16.mxu0 0
      %938 = vmatmul.mubr.bf16.gmra.mrb[0].mxu0 %v828
      %v939 = vpop.f32.mrb[0].mxu0
      %v940 = vadd.f32 %v645, %v939
      %v941 = vpop.f32.mrb[0].mxu0
      %v942 = vpop.f32.mrb[0].mxu0
      %v943 = vadd.f32 %v648, %v942
      %v944 = vpop.f32.mrb[0].mxu0
      %945 = vmatprep.mubr.bf16.mxu0 0
      %946 = vmatmul.mubr.bf16.gmra.mrb[0].mxu0 %v831
      %v947 = vpop.f32.mrb[0].mxu0
      %v948 = vadd.f32 %v653, %v947
      %v949 = vpop.f32.mrb[0].mxu0
      %v950 = vpop.f32.mrb[0].mxu0
      %v951 = vadd.f32 %v656, %v950
      %v952 = vpop.f32.mrb[0].mxu0
      %953 = vmatprep.mubr.bf16.mxu0 0
      %954 = vmatmul.mubr.bf16.gmra.mrb[0].mxu0 %v834
      %v955 = vpop.f32.mrb[0].mxu0
      %v956 = vadd.f32 %v661, %v955
      %v957 = vpop.f32.mrb[0].mxu0
      %v958 = vpop.f32.mrb[0].mxu0
      %v959 = vadd.f32 %v664, %v958
      %v960 = vpop.f32.mrb[0].mxu0
      %961 = vmatprep.mubr.bf16.mxu0 0
      %962 = vmatmul.mubr.bf16.gmra.mrb[0].mxu0 %v837
      %v963 = vpop.f32.mrb[0].mxu0
      %v964 = vadd.f32 %v669, %v963
      %v965 = vpop.f32.mrb[0].mxu0
      %v966 = vpop.f32.mrb[0].mxu0
      %v967 = vadd.f32 %v672, %v966
      %v968 = vpop.f32.mrb[0].mxu0
      %969 = vmatprep.mubr.bf16.mxu0 0
      %970 = vmatmul.mubr.bf16.gmra.mrb[0].mxu0 %v840
      %v971 = vpop.f32.mrb[0].mxu0
      %v972 = vadd.f32 %v677, %v971
      %v973 = vpop.f32.mrb[0].mxu0
      %v974 = vpop.f32.mrb[0].mxu0
      %v975 = vadd.f32 %v680, %v974
      %v976 = vpop.f32.mrb[0].mxu0
      %977 = vmatprep.mubr.bf16.mxu0 0
      %978 = vmatmul.mubr.bf16.gmra.mrb[0].mxu0 %v843
      %v979 = vpop.f32.mrb[0].mxu0
      %v980 = vadd.f32 %v685, %v979
      %v981 = vpop.f32.mrb[0].mxu0
      %v982 = vpop.f32.mrb[0].mxu0
      %v983 = vadd.f32 %v688, %v982
      %v984 = vpop.f32.mrb[0].mxu0
      %985 = vmatprep.mubr.bf16.mxu0 0
      %986 = vmatmul.mubr.bf16.gmra.mrb[0].mxu0 %v846
      %v987 = vpop.f32.mrb[0].mxu0
      %v988 = vadd.f32 %v693, %v987
      %v989 = vpop.f32.mrb[0].mxu0
      %v990 = vpop.f32.mrb[0].mxu0
      %v991 = vadd.f32 %v696, %v990
      %v992 = vpop.f32.mrb[0].mxu0
      %993 = vmatprep.mubr.bf16.mxu0 0
      %994 = vmatmul.mubr.bf16.gmra.mrb[0].mxu0 %v849
      %v995 = vpop.f32.mrb[0].mxu0
      %v996 = vadd.f32 %v701, %v995
      %v997 = vpop.f32.mrb[0].mxu0
      %v998 = vpop.f32.mrb[0].mxu0
      %v999 = vadd.f32 %v704, %v998
      %v1000 = vpop.f32.mrb[0].mxu0
      %1001 = vmatprep.mubr.bf16.mxu0 0
      %1002 = vmatmul.mubr.bf16.gmra.mrb[0].mxu0 %v852
      %v1003 = vpop.f32.mrb[0].mxu0
      %v1004 = vadd.f32 %v709, %v1003
      %v1005 = vpop.f32.mrb[0].mxu0
      %v1006 = vpop.f32.mrb[0].mxu0
      %v1007 = vadd.f32 %v712, %v1006
      %v1008 = vpop.f32.mrb[0].mxu0
      %1009 = vmatprep.mubr.bf16.mxu0 0
      %1010 = vmatmul.mubr.bf16.gmra.mrb[0].mxu0 %v855
      %v1011 = vpop.f32.mrb[0].mxu0
      %v1012 = vadd.f32 %v717, %v1011
      %v1013 = vpop.f32.mrb[0].mxu0
      %v1014 = vpop.f32.mrb[0].mxu0
      %v1015 = vadd.f32 %v720, %v1014
      %v1016 = vpop.f32.mrb[0].mxu0
      %1017 = vdwg.mxu0
      %v1018 = vld [vmem:[%s4] sm:$0x1]
      %v1020 = vlaneseq
      %v1021 = vshrl.u32 %v1020, 7
      %v1022 = vsub.s32 0, %v1021
      %v1023 = vrot.slane %v1018, %v1022
      %v1025 = vadd.f32 %v892, %v1023
      %v1026 = vadd.f32 %v895, %v1023
      %v1027 = vadd.f32 %v900, %v1023
      %v1028 = vadd.f32 %v903, %v1023
      %v1029 = vadd.f32 %v908, %v1023
      %v1030 = vadd.f32 %v911, %v1023
      %v1031 = vadd.f32 %v916, %v1023
      %v1032 = vadd.f32 %v919, %v1023
      %v1033 = vadd.f32 %v924, %v1023
      %v1034 = vadd.f32 %v927, %v1023
      %v1035 = vadd.f32 %v932, %v1023
      %v1036 = vadd.f32 %v935, %v1023
      %v1037 = vadd.f32 %v940, %v1023
      %v1038 = vadd.f32 %v943, %v1023
      %v1039 = vadd.f32 %v948, %v1023
      %v1040 = vadd.f32 %v951, %v1023
      %v1041 = vadd.f32 %v956, %v1023
      %v1042 = vadd.f32 %v959, %v1023
      %v1043 = vadd.f32 %v964, %v1023
      %v1044 = vadd.f32 %v967, %v1023
      %v1045 = vadd.f32 %v972, %v1023
      %v1046 = vadd.f32 %v975, %v1023
      %v1047 = vadd.f32 %v980, %v1023
      %v1048 = vadd.f32 %v983, %v1023
      %v1049 = vadd.f32 %v988, %v1023
      %v1050 = vadd.f32 %v991, %v1023
      %v1051 = vadd.f32 %v996, %v1023
      %v1052 = vadd.f32 %v999, %v1023
      %v1053 = vadd.f32 %v1004, %v1023
      %v1054 = vadd.f32 %v1007, %v1023
      %v1055 = vadd.f32 %v1012, %v1023
      %v1056 = vadd.f32 %v1015, %v1023
      %v1057 = vmax.f32 %v1025, 0.0
      %v1058 = vmax.f32 %v1026, 0.0
      %v1059 = vmax.f32 %v1027, 0.0
      %v1060 = vmax.f32 %v1028, 0.0
      %v1061 = vmax.f32 %v1029, 0.0
      %v1062 = vmax.f32 %v1030, 0.0
      %v1063 = vmax.f32 %v1031, 0.0
      %v1064 = vmax.f32 %v1032, 0.0
      %v1065 = vmax.f32 %v1033, 0.0
      %v1066 = vmax.f32 %v1034, 0.0
      %v1067 = vmax.f32 %v1035, 0.0
      %v1068 = vmax.f32 %v1036, 0.0
      %v1069 = vmax.f32 %v1037, 0.0
      %v1070 = vmax.f32 %v1038, 0.0
      %v1071 = vmax.f32 %v1039, 0.0
      %v1072 = vmax.f32 %v1040, 0.0
      %v1073 = vmax.f32 %v1041, 0.0
      %v1074 = vmax.f32 %v1042, 0.0
      %v1075 = vmax.f32 %v1043, 0.0
      %v1076 = vmax.f32 %v1044, 0.0
      %v1077 = vmax.f32 %v1045, 0.0
      %v1078 = vmax.f32 %v1046, 0.0
      %v1079 = vmax.f32 %v1047, 0.0
      %v1080 = vmax.f32 %v1048, 0.0
      %v1081 = vmax.f32 %v1049, 0.0
      %v1082 = vmax.f32 %v1050, 0.0
      %v1083 = vmax.f32 %v1051, 0.0
      %v1084 = vmax.f32 %v1052, 0.0
      %v1085 = vmax.f32 %v1053, 0.0
      %v1086 = vmax.f32 %v1054, 0.0
      %v1087 = vmax.f32 %v1055, 0.0
      %v1088 = vmax.f32 %v1056, 0.0
      %v1089 = vpack.c.bf16 %v1058, %v1057
      %v1090 = vpack.c.bf16 %v1060, %v1059
      %v1091 = vpack.c.bf16 %v1062, %v1061
      %v1092 = vpack.c.bf16 %v1064, %v1063
      %v1093 = vpack.c.bf16 %v1066, %v1065
      %v1094 = vpack.c.bf16 %v1068, %v1067
      %v1095 = vpack.c.bf16 %v1070, %v1069
      %v1096 = vpack.c.bf16 %v1072, %v1071
      %v1097 = vpack.c.bf16 %v1074, %v1073
      %v1098 = vpack.c.bf16 %v1076, %v1075
      %v1099 = vpack.c.bf16 %v1078, %v1077
      %v1100 = vpack.c.bf16 %v1080, %v1079
      %v1101 = vpack.c.bf16 %v1082, %v1081
      %v1102 = vpack.c.bf16 %v1084, %v1083
      %v1103 = vpack.c.bf16 %v1086, %v1085
      %v1104 = vpack.c.bf16 %v1088, %v1087
      %v1105 = vld [vmem:[%s5] sm:$0xf]
      %v1106 = vld [vmem:[%s5 + $0x4] sm:$0xf]
      %v1107 = vld [vmem:[%s5 + $0x8] sm:$0xf]
      %v1108 = vld [vmem:[%s5 + $0xc] sm:$0xf]
      %v1109 = vld [vmem:[%s5 + $0x10] sm:$0xf]
      %v1110 = vld [vmem:[%s5 + $0x14] sm:$0xf]
      %v1111 = vld [vmem:[%s5 + $0x18] sm:$0xf]
      %v1112 = vld [vmem:[%s5 + $0x1c] sm:$0xf]
      %v1113 = vld [vmem:[%s5 + $0x20] sm:$0xf]
      %v1114 = vld [vmem:[%s5 + $0x24] sm:$0xf]
      %v1115 = vld [vmem:[%s5 + $0x28] sm:$0xf]
      %v1116 = vld [vmem:[%s5 + $0x2c] sm:$0xf]
      %v1117 = vld [vmem:[%s5 + $0x30] sm:$0xf]
      %v1118 = vld [vmem:[%s5 + $0x34] sm:$0xf]
      %v1119 = vld [vmem:[%s5 + $0x38] sm:$0xf]
      %v1120 = vld [vmem:[%s5 + $0x3c] sm:$0xf]
      %v1121 = vld [vmem:[%s6] sm:$0x1]
      %v1123 = vlaneseq
      %v1124 = vshrl.u32 %v1123, 7
      %v1125 = vsub.s32 0, %v1124
      %v1126 = vrot.slane %v1121, %v1125
      %v1144 = vunpack.c.l.b16 %v1105
      %v1145 = vunpack.c.l.b16 %v1106
      %v1146 = vunpack.c.l.b16 %v1107
      %v1147 = vunpack.c.l.b16 %v1108
      %v1148 = vunpack.c.l.b16 %v1109
      %v1149 = vunpack.c.l.b16 %v1110
      %v1150 = vunpack.c.l.b16 %v1111
      %v1151 = vunpack.c.l.b16 %v1112
      %v1152 = vunpack.c.l.b16 %v1113
      %v1153 = vunpack.c.l.b16 %v1114
      %v1154 = vunpack.c.l.b16 %v1115
      %v1155 = vunpack.c.l.b16 %v1116
      %v1156 = vunpack.c.l.b16 %v1117
      %v1157 = vunpack.c.l.b16 %v1118
      %v1158 = vunpack.c.l.b16 %v1119
      %v1159 = vunpack.c.l.b16 %v1120
      %v1160 = vpack.c.b16 %v1145, %v1144
      %v1161 = vpack.c.b16 %v1147, %v1146
      %v1162 = vpack.c.b16 %v1149, %v1148
      %v1163 = vpack.c.b16 %v1151, %v1150
      %v1164 = vpack.c.b16 %v1153, %v1152
      %v1165 = vpack.c.b16 %v1155, %v1154
      %v1166 = vpack.c.b16 %v1157, %v1156
      %v1167 = vpack.c.b16 %v1159, %v1158
      %1176 = vmatprep.subr.bf16.mxu0 0
      %1177 = vmatpush1.bf16.msra.mxu0 %v1160
      %1178 = vmatprep.subr.bf16.mxu0 0
      %1179 = vmatpush1.bf16.msra.mxu0 %v1161
      %1180 = vmatprep.subr.bf16.mxu0 0
      %1181 = vmatpush1.bf16.msra.mxu0 %v1162
      %1182 = vmatprep.subr.bf16.mxu0 0
      %1183 = vmatpush1.bf16.msra.mxu0 %v1163
      %1184 = vmatprep.subr.bf16.mxu0 0
      %1185 = vmatpush1.bf16.msra.mxu0 %v1164
      %1186 = vmatprep.subr.bf16.mxu0 0
      %1187 = vmatpush1.bf16.msra.mxu0 %v1165
      %1188 = vmatprep.subr.bf16.mxu0 0
      %1189 = vmatpush1.bf16.msra.mxu0 %v1166
      %1190 = vmatprep.subr.bf16.mxu0 0
      %1191 = vmatpush1.bf16.msra.mxu0 %v1167
      %1192 = vmatprep.subr.bf16.mxu0 0
      %1193 = vmatpush1.bf16.msra.mxu0 0
      %1194 = vmatprep.subr.bf16.mxu0 0
      %1195 = vmatpush1.bf16.msra.mxu0 0
      %1196 = vmatprep.subr.bf16.mxu0 0
      %1197 = vmatpush1.bf16.msra.mxu0 0
      %1198 = vmatprep.subr.bf16.mxu0 0
      %1199 = vmatpush1.bf16.msra.mxu0 0
      %1200 = vmatprep.subr.bf16.mxu0 0
      %1201 = vmatpush1.bf16.msra.mxu0 0
      %1202 = vmatprep.subr.bf16.mxu0 0
      %1203 = vmatpush1.bf16.msra.mxu0 0
      %1204 = vmatprep.subr.bf16.mxu0 0
      %1205 = vmatpush1.bf16.msra.mxu0 0
      %1206 = vmatprep.subr.bf16.mxu0 0
      %1207 = vmatpush1.bf16.msra.mxu0 0
      %1208 = vmatprep.mubr.bf16.mxu0 0
      %1209 = vmatmul.mubr.bf16.gmra.mrb[0].mxu0 %v1089
      %v1210 = vpop.f32.mrb[0].mxu0
      %v1211 = vadd.f32 %v1126, %v1210
      %v1212 = vpop.f32.mrb[0].mxu0
      %v1213 = vpop.f32.mrb[0].mxu0
      %v1214 = vadd.f32 %v1126, %v1213
      %v1215 = vpop.f32.mrb[0].mxu0
      %1216 = vmatprep.mubr.bf16.mxu0 0
      %1217 = vmatmul.mubr.bf16.gmra.mrb[0].mxu0 %v1090
      %v1218 = vpop.f32.mrb[0].mxu0
      %v1219 = vadd.f32 %v1126, %v1218
      %v1220 = vpop.f32.mrb[0].mxu0
      %v1221 = vpop.f32.mrb[0].mxu0
      %v1222 = vadd.f32 %v1126, %v1221
      %v1223 = vpop.f32.mrb[0].mxu0
      %1224 = vmatprep.mubr.bf16.mxu0 0
      %1225 = vmatmul.mubr.bf16.gmra.mrb[0].mxu0 %v1091
      %v1226 = vpop.f32.mrb[0].mxu0
      %v1227 = vadd.f32 %v1126, %v1226
      %v1228 = vpop.f32.mrb[0].mxu0
      %v1229 = vpop.f32.mrb[0].mxu0
      %v1230 = vadd.f32 %v1126, %v1229
      %v1231 = vpop.f32.mrb[0].mxu0
      %1232 = vmatprep.mubr.bf16.mxu0 0
      %1233 = vmatmul.mubr.bf16.gmra.mrb[0].mxu0 %v1092
      %v1234 = vpop.f32.mrb[0].mxu0
      %v1235 = vadd.f32 %v1126, %v1234
      %v1236 = vpop.f32.mrb[0].mxu0
      %v1237 = vpop.f32.mrb[0].mxu0
      %v1238 = vadd.f32 %v1126, %v1237
      %v1239 = vpop.f32.mrb[0].mxu0
      %1240 = vmatprep.mubr.bf16.mxu0 0
      %1241 = vmatmul.mubr.bf16.gmra.mrb[0].mxu0 %v1093
      %v1242 = vpop.f32.mrb[0].mxu0
      %v1243 = vadd.f32 %v1126, %v1242
      %v1244 = vpop.f32.mrb[0].mxu0
      %v1245 = vpop.f32.mrb[0].mxu0
      %v1246 = vadd.f32 %v1126, %v1245
      %v1247 = vpop.f32.mrb[0].mxu0
      %1248 = vmatprep.mubr.bf16.mxu0 0
      %1249 = vmatmul.mubr.bf16.gmra.mrb[0].mxu0 %v1094
      %v1250 = vpop.f32.mrb[0].mxu0
      %v1251 = vadd.f32 %v1126, %v1250
      %v1252 = vpop.f32.mrb[0].mxu0
      %v1253 = vpop.f32.mrb[0].mxu0
      %v1254 = vadd.f32 %v1126, %v1253
      %v1255 = vpop.f32.mrb[0].mxu0
      %1256 = vmatprep.mubr.bf16.mxu0 0
      %1257 = vmatmul.mubr.bf16.gmra.mrb[0].mxu0 %v1095
      %v1258 = vpop.f32.mrb[0].mxu0
      %v1259 = vadd.f32 %v1126, %v1258
      %v1260 = vpop.f32.mrb[0].mxu0
      %v1261 = vpop.f32.mrb[0].mxu0
      %v1262 = vadd.f32 %v1126, %v1261
      %v1263 = vpop.f32.mrb[0].mxu0
      %1264 = vmatprep.mubr.bf16.mxu0 0
      %1265 = vmatmul.mubr.bf16.gmra.mrb[0].mxu0 %v1096
      %v1266 = vpop.f32.mrb[0].mxu0
      %v1267 = vadd.f32 %v1126, %v1266
      %v1268 = vpop.f32.mrb[0].mxu0
      %v1269 = vpop.f32.mrb[0].mxu0
      %v1270 = vadd.f32 %v1126, %v1269
      %v1271 = vpop.f32.mrb[0].mxu0
      %1272 = vmatprep.mubr.bf16.mxu0 0
      %1273 = vmatmul.mubr.bf16.gmra.mrb[0].mxu0 %v1097
      %v1274 = vpop.f32.mrb[0].mxu0
      %v1275 = vadd.f32 %v1126, %v1274
      %v1276 = vpop.f32.mrb[0].mxu0
      %v1277 = vpop.f32.mrb[0].mxu0
      %v1278 = vadd.f32 %v1126, %v1277
      %v1279 = vpop.f32.mrb[0].mxu0
      %1280 = vmatprep.mubr.bf16.mxu0 0
      %1281 = vmatmul.mubr.bf16.gmra.mrb[0].mxu0 %v1098
      %v1282 = vpop.f32.mrb[0].mxu0
      %v1283 = vadd.f32 %v1126, %v1282
      %v1284 = vpop.f32.mrb[0].mxu0
      %v1285 = vpop.f32.mrb[0].mxu0
      %v1286 = vadd.f32 %v1126, %v1285
      %v1287 = vpop.f32.mrb[0].mxu0
      %1288 = vmatprep.mubr.bf16.mxu0 0
      %1289 = vmatmul.mubr.bf16.gmra.mrb[0].mxu0 %v1099
      %v1290 = vpop.f32.mrb[0].mxu0
      %v1291 = vadd.f32 %v1126, %v1290
      %v1292 = vpop.f32.mrb[0].mxu0
      %v1293 = vpop.f32.mrb[0].mxu0
      %v1294 = vadd.f32 %v1126, %v1293
      %v1295 = vpop.f32.mrb[0].mxu0
      %1296 = vmatprep.mubr.bf16.mxu0 0
      %1297 = vmatmul.mubr.bf16.gmra.mrb[0].mxu0 %v1100
      %v1298 = vpop.f32.mrb[0].mxu0
      %v1299 = vadd.f32 %v1126, %v1298
      %v1300 = vpop.f32.mrb[0].mxu0
      %v1301 = vpop.f32.mrb[0].mxu0
      %v1302 = vadd.f32 %v1126, %v1301
      %v1303 = vpop.f32.mrb[0].mxu0
      %1304 = vmatprep.mubr.bf16.mxu0 0
      %1305 = vmatmul.mubr.bf16.gmra.mrb[0].mxu0 %v1101
      %v1306 = vpop.f32.mrb[0].mxu0
      %v1307 = vadd.f32 %v1126, %v1306
      %v1308 = vpop.f32.mrb[0].mxu0
      %v1309 = vpop.f32.mrb[0].mxu0
      %v1310 = vadd.f32 %v1126, %v1309
      %v1311 = vpop.f32.mrb[0].mxu0
      %1312 = vmatprep.mubr.bf16.mxu0 0
      %1313 = vmatmul.mubr.bf16.gmra.mrb[0].mxu0 %v1102
      %v1314 = vpop.f32.mrb[0].mxu0
      %v1315 = vadd.f32 %v1126, %v1314
      %v1316 = vpop.f32.mrb[0].mxu0
      %v1317 = vpop.f32.mrb[0].mxu0
      %v1318 = vadd.f32 %v1126, %v1317
      %v1319 = vpop.f32.mrb[0].mxu0
      %1320 = vmatprep.mubr.bf16.mxu0 0
      %1321 = vmatmul.mubr.bf16.gmra.mrb[0].mxu0 %v1103
      %v1322 = vpop.f32.mrb[0].mxu0
      %v1323 = vadd.f32 %v1126, %v1322
      %v1324 = vpop.f32.mrb[0].mxu0
      %v1325 = vpop.f32.mrb[0].mxu0
      %v1326 = vadd.f32 %v1126, %v1325
      %v1327 = vpop.f32.mrb[0].mxu0
      %1328 = vmatprep.mubr.bf16.mxu0 0
      %1329 = vmatmul.mubr.bf16.gmra.mrb[0].mxu0 %v1104
      %v1330 = vpop.f32.mrb[0].mxu0
      %v1331 = vadd.f32 %v1126, %v1330
      %v1332 = vpop.f32.mrb[0].mxu0
      %v1333 = vpop.f32.mrb[0].mxu0
      %v1334 = vadd.f32 %v1126, %v1333
      %v1335 = vpop.f32.mrb[0].mxu0
      %1336 = vdwg.mxu0
      %v1337 = vmax.f32 %v1211, 0.0
      %v1338 = vmax.f32 %v1214, 0.0
      %v1339 = vmax.f32 %v1219, 0.0
      %v1340 = vmax.f32 %v1222, 0.0
      %v1341 = vmax.f32 %v1227, 0.0
      %v1342 = vmax.f32 %v1230, 0.0
      %v1343 = vmax.f32 %v1235, 0.0
      %v1344 = vmax.f32 %v1238, 0.0
      %v1345 = vmax.f32 %v1243, 0.0
      %v1346 = vmax.f32 %v1246, 0.0
      %v1347 = vmax.f32 %v1251, 0.0
      %v1348 = vmax.f32 %v1254, 0.0
      %v1349 = vmax.f32 %v1259, 0.0
      %v1350 = vmax.f32 %v1262, 0.0
      %v1351 = vmax.f32 %v1267, 0.0
      %v1352 = vmax.f32 %v1270, 0.0
      %v1353 = vmax.f32 %v1275, 0.0
      %v1354 = vmax.f32 %v1278, 0.0
      %v1355 = vmax.f32 %v1283, 0.0
      %v1356 = vmax.f32 %v1286, 0.0
      %v1357 = vmax.f32 %v1291, 0.0
      %v1358 = vmax.f32 %v1294, 0.0
      %v1359 = vmax.f32 %v1299, 0.0
      %v1360 = vmax.f32 %v1302, 0.0
      %v1361 = vmax.f32 %v1307, 0.0
      %v1362 = vmax.f32 %v1310, 0.0
      %v1363 = vmax.f32 %v1315, 0.0
      %v1364 = vmax.f32 %v1318, 0.0
      %v1365 = vmax.f32 %v1323, 0.0
      %v1366 = vmax.f32 %v1326, 0.0
      %v1367 = vmax.f32 %v1331, 0.0
      %v1368 = vmax.f32 %v1334, 0.0
      %v1369 = vpack.c.bf16 %v1338, %v1337
      %v1370 = vpack.c.bf16 %v1340, %v1339
      %v1371 = vpack.c.bf16 %v1342, %v1341
      %v1372 = vpack.c.bf16 %v1344, %v1343
      %v1373 = vpack.c.bf16 %v1346, %v1345
      %v1374 = vpack.c.bf16 %v1348, %v1347
      %v1375 = vpack.c.bf16 %v1350, %v1349
      %v1376 = vpack.c.bf16 %v1352, %v1351
      %v1377 = vpack.c.bf16 %v1354, %v1353
      %v1378 = vpack.c.bf16 %v1356, %v1355
      %v1379 = vpack.c.bf16 %v1358, %v1357
      %v1380 = vpack.c.bf16 %v1360, %v1359
      %v1381 = vpack.c.bf16 %v1362, %v1361
      %v1382 = vpack.c.bf16 %v1364, %v1363
      %v1383 = vpack.c.bf16 %v1366, %v1365
      %v1384 = vpack.c.bf16 %v1368, %v1367
      %v1385 = vld [vmem:[%s7] sm:$0xf]
      %v1386 = vld [vmem:[%s7 + $0x4] sm:$0xf]
      %v1387 = vld [vmem:[%s7 + $0x8] sm:$0xf]
      %v1388 = vld [vmem:[%s7 + $0xc] sm:$0xf]
      %v1389 = vld [vmem:[%s7 + $0x10] sm:$0xf]
      %v1390 = vld [vmem:[%s7 + $0x14] sm:$0xf]
      %v1391 = vld [vmem:[%s7 + $0x18] sm:$0xf]
      %v1392 = vld [vmem:[%s7 + $0x1c] sm:$0xf]
      %v1393 = vld [vmem:[%s7 + $0x20] sm:$0xf]
      %v1394 = vld [vmem:[%s7 + $0x24] sm:$0xf]
      %v1395 = vld [vmem:[%s7 + $0x28] sm:$0xf]
      %v1396 = vld [vmem:[%s7 + $0x2c] sm:$0xf]
      %v1397 = vld [vmem:[%s7 + $0x30] sm:$0xf]
      %v1398 = vld [vmem:[%s7 + $0x34] sm:$0xf]
      %v1399 = vld [vmem:[%s7 + $0x38] sm:$0xf]
      %v1400 = vld [vmem:[%s7 + $0x3c] sm:$0xf]
      %v1401 = vld [vmem:[%s8] sm:$0x1]
      %v1403 = vlaneseq
      %v1404 = vshrl.u32 %v1403, 7
      %v1405 = vsub.s32 0, %v1404
      %v1406 = vrot.slane %v1401, %v1405
      %v1424 = vunpack.c.l.b16 %v1385
      %v1425 = vunpack.c.l.b16 %v1386
      %v1426 = vunpack.c.l.b16 %v1387
      %v1427 = vunpack.c.l.b16 %v1388
      %v1428 = vunpack.c.l.b16 %v1389
      %v1429 = vunpack.c.l.b16 %v1390
      %v1430 = vunpack.c.l.b16 %v1391
      %v1431 = vunpack.c.l.b16 %v1392
      %v1432 = vunpack.c.l.b16 %v1393
      %v1433 = vunpack.c.l.b16 %v1394
      %v1434 = vunpack.c.l.b16 %v1395
      %v1435 = vunpack.c.l.b16 %v1396
      %v1436 = vunpack.c.l.b16 %v1397
      %v1437 = vunpack.c.l.b16 %v1398
      %v1438 = vunpack.c.l.b16 %v1399
      %v1439 = vunpack.c.l.b16 %v1400
      %v1440 = vpack.c.b16 %v1425, %v1424
      %v1441 = vpack.c.b16 %v1427, %v1426
      %v1442 = vpack.c.b16 %v1429, %v1428
      %v1443 = vpack.c.b16 %v1431, %v1430
      %v1444 = vpack.c.b16 %v1433, %v1432
      %v1445 = vpack.c.b16 %v1435, %v1434
      %v1446 = vpack.c.b16 %v1437, %v1436
      %v1447 = vpack.c.b16 %v1439, %v1438
      %1456 = vmatprep.subr.bf16.mxu0 0
      %1457 = vmatpush1.bf16.msra.mxu0 %v1440
      %1458 = vmatprep.subr.bf16.mxu0 0
      %1459 = vmatpush1.bf16.msra.mxu0 %v1441
      %1460 = vmatprep.subr.bf16.mxu0 0
      %1461 = vmatpush1.bf16.msra.mxu0 %v1442
      %1462 = vmatprep.subr.bf16.mxu0 0
      %1463 = vmatpush1.bf16.msra.mxu0 %v1443
      %1464 = vmatprep.subr.bf16.mxu0 0
      %1465 = vmatpush1.bf16.msra.mxu0 %v1444
      %1466 = vmatprep.subr.bf16.mxu0 0
      %1467 = vmatpush1.bf16.msra.mxu0 %v1445
      %1468 = vmatprep.subr.bf16.mxu0 0
      %1469 = vmatpush1.bf16.msra.mxu0 %v1446
      %1470 = vmatprep.subr.bf16.mxu0 0
      %1471 = vmatpush1.bf16.msra.mxu0 %v1447
      %1472 = vmatprep.subr.bf16.mxu0 0
      %1473 = vmatpush1.bf16.msra.mxu0 0
      %1474 = vmatprep.subr.bf16.mxu0 0
      %1475 = vmatpush1.bf16.msra.mxu0 0
      %1476 = vmatprep.subr.bf16.mxu0 0
      %1477 = vmatpush1.bf16.msra.mxu0 0
      %1478 = vmatprep.subr.bf16.mxu0 0
      %1479 = vmatpush1.bf16.msra.mxu0 0
      %1480 = vmatprep.subr.bf16.mxu0 0
      %1481 = vmatpush1.bf16.msra.mxu0 0
      %1482 = vmatprep.subr.bf16.mxu0 0
      %1483 = vmatpush1.bf16.msra.mxu0 0
      %1484 = vmatprep.subr.bf16.mxu0 0
      %1485 = vmatpush1.bf16.msra.mxu0 0
      %1486 = vmatprep.subr.bf16.mxu0 0
      %1487 = vmatpush1.bf16.msra.mxu0 0
      %1488 = vmatprep.mubr.bf16.mxu0 0
      %1489 = vmatmul.mubr.bf16.gmra.mrb[0].mxu0 %v1369
      %v1490 = vpop.f32.mrb[0].mxu0
      %v1491 = vadd.f32 %v1406, %v1490
      %v1492 = vpop.f32.mrb[0].mxu0
      %v1493 = vpop.f32.mrb[0].mxu0
      %v1494 = vadd.f32 %v1406, %v1493
      %v1495 = vpop.f32.mrb[0].mxu0
      %1496 = vmatprep.mubr.bf16.mxu0 0
      %1497 = vmatmul.mubr.bf16.gmra.mrb[0].mxu0 %v1370
      %v1498 = vpop.f32.mrb[0].mxu0
      %v1499 = vadd.f32 %v1406, %v1498
      %v1500 = vpop.f32.mrb[0].mxu0
      %v1501 = vpop.f32.mrb[0].mxu0
      %v1502 = vadd.f32 %v1406, %v1501
      %v1503 = vpop.f32.mrb[0].mxu0
      %1504 = vmatprep.mubr.bf16.mxu0 0
      %1505 = vmatmul.mubr.bf16.gmra.mrb[0].mxu0 %v1371
      %v1506 = vpop.f32.mrb[0].mxu0
      %v1507 = vadd.f32 %v1406, %v1506
      %v1508 = vpop.f32.mrb[0].mxu0
      %v1509 = vpop.f32.mrb[0].mxu0
      %v1510 = vadd.f32 %v1406, %v1509
      %v1511 = vpop.f32.mrb[0].mxu0
      %1512 = vmatprep.mubr.bf16.mxu0 0
      %1513 = vmatmul.mubr.bf16.gmra.mrb[0].mxu0 %v1372
      %v1514 = vpop.f32.mrb[0].mxu0
      %v1515 = vadd.f32 %v1406, %v1514
      %v1516 = vpop.f32.mrb[0].mxu0
      %v1517 = vpop.f32.mrb[0].mxu0
      %v1518 = vadd.f32 %v1406, %v1517
      %v1519 = vpop.f32.mrb[0].mxu0
      %1520 = vmatprep.mubr.bf16.mxu0 0
      %1521 = vmatmul.mubr.bf16.gmra.mrb[0].mxu0 %v1373
      %v1522 = vpop.f32.mrb[0].mxu0
      %v1523 = vadd.f32 %v1406, %v1522
      %v1524 = vpop.f32.mrb[0].mxu0
      %v1525 = vpop.f32.mrb[0].mxu0
      %v1526 = vadd.f32 %v1406, %v1525
      %v1527 = vpop.f32.mrb[0].mxu0
      %1528 = vmatprep.mubr.bf16.mxu0 0
      %1529 = vmatmul.mubr.bf16.gmra.mrb[0].mxu0 %v1374
      %v1530 = vpop.f32.mrb[0].mxu0
      %v1531 = vadd.f32 %v1406, %v1530
      %v1532 = vpop.f32.mrb[0].mxu0
      %v1533 = vpop.f32.mrb[0].mxu0
      %v1534 = vadd.f32 %v1406, %v1533
      %v1535 = vpop.f32.mrb[0].mxu0
      %1536 = vmatprep.mubr.bf16.mxu0 0
      %1537 = vmatmul.mubr.bf16.gmra.mrb[0].mxu0 %v1375
      %v1538 = vpop.f32.mrb[0].mxu0
      %v1539 = vadd.f32 %v1406, %v1538
      %v1540 = vpop.f32.mrb[0].mxu0
      %v1541 = vpop.f32.mrb[0].mxu0
      %v1542 = vadd.f32 %v1406, %v1541
      %v1543 = vpop.f32.mrb[0].mxu0
      %1544 = vmatprep.mubr.bf16.mxu0 0
      %1545 = vmatmul.mubr.bf16.gmra.mrb[0].mxu0 %v1376
      %v1546 = vpop.f32.mrb[0].mxu0
      %v1547 = vadd.f32 %v1406, %v1546
      %v1548 = vpop.f32.mrb[0].mxu0
      %v1549 = vpop.f32.mrb[0].mxu0
      %v1550 = vadd.f32 %v1406, %v1549
      %v1551 = vpop.f32.mrb[0].mxu0
      %1552 = vmatprep.mubr.bf16.mxu0 0
      %1553 = vmatmul.mubr.bf16.gmra.mrb[0].mxu0 %v1377
      %v1554 = vpop.f32.mrb[0].mxu0
      %v1555 = vadd.f32 %v1406, %v1554
      %v1556 = vpop.f32.mrb[0].mxu0
      %v1557 = vpop.f32.mrb[0].mxu0
      %v1558 = vadd.f32 %v1406, %v1557
      %v1559 = vpop.f32.mrb[0].mxu0
      %1560 = vmatprep.mubr.bf16.mxu0 0
      %1561 = vmatmul.mubr.bf16.gmra.mrb[0].mxu0 %v1378
      %v1562 = vpop.f32.mrb[0].mxu0
      %v1563 = vadd.f32 %v1406, %v1562
      %v1564 = vpop.f32.mrb[0].mxu0
      %v1565 = vpop.f32.mrb[0].mxu0
      %v1566 = vadd.f32 %v1406, %v1565
      %v1567 = vpop.f32.mrb[0].mxu0
      %1568 = vmatprep.mubr.bf16.mxu0 0
      %1569 = vmatmul.mubr.bf16.gmra.mrb[0].mxu0 %v1379
      %v1570 = vpop.f32.mrb[0].mxu0
      %v1571 = vadd.f32 %v1406, %v1570
      %v1572 = vpop.f32.mrb[0].mxu0
      %v1573 = vpop.f32.mrb[0].mxu0
      %v1574 = vadd.f32 %v1406, %v1573
      %v1575 = vpop.f32.mrb[0].mxu0
      %1576 = vmatprep.mubr.bf16.mxu0 0
      %1577 = vmatmul.mubr.bf16.gmra.mrb[0].mxu0 %v1380
      %v1578 = vpop.f32.mrb[0].mxu0
      %v1579 = vadd.f32 %v1406, %v1578
      %v1580 = vpop.f32.mrb[0].mxu0
      %v1581 = vpop.f32.mrb[0].mxu0
      %v1582 = vadd.f32 %v1406, %v1581
      %v1583 = vpop.f32.mrb[0].mxu0
      %1584 = vmatprep.mubr.bf16.mxu0 0
      %1585 = vmatmul.mubr.bf16.gmra.mrb[0].mxu0 %v1381
      %v1586 = vpop.f32.mrb[0].mxu0
      %v1587 = vadd.f32 %v1406, %v1586
      %v1588 = vpop.f32.mrb[0].mxu0
      %v1589 = vpop.f32.mrb[0].mxu0
      %v1590 = vadd.f32 %v1406, %v1589
      %v1591 = vpop.f32.mrb[0].mxu0
      %1592 = vmatprep.mubr.bf16.mxu0 0
      %1593 = vmatmul.mubr.bf16.gmra.mrb[0].mxu0 %v1382
      %v1594 = vpop.f32.mrb[0].mxu0
      %v1595 = vadd.f32 %v1406, %v1594
      %v1596 = vpop.f32.mrb[0].mxu0
      %v1597 = vpop.f32.mrb[0].mxu0
      %v1598 = vadd.f32 %v1406, %v1597
      %v1599 = vpop.f32.mrb[0].mxu0
      %1600 = vmatprep.mubr.bf16.mxu0 0
      %1601 = vmatmul.mubr.bf16.gmra.mrb[0].mxu0 %v1383
      %v1602 = vpop.f32.mrb[0].mxu0
      %v1603 = vadd.f32 %v1406, %v1602
      %v1604 = vpop.f32.mrb[0].mxu0
      %v1605 = vpop.f32.mrb[0].mxu0
      %v1606 = vadd.f32 %v1406, %v1605
      %v1607 = vpop.f32.mrb[0].mxu0
      %1608 = vmatprep.mubr.bf16.mxu0 0
      %1609 = vmatmul.mubr.bf16.gmra.mrb[0].mxu0 %v1384
      %v1610 = vpop.f32.mrb[0].mxu0
      %v1611 = vadd.f32 %v1406, %v1610
      %v1612 = vpop.f32.mrb[0].mxu0
      %v1613 = vpop.f32.mrb[0].mxu0
      %v1614 = vadd.f32 %v1406, %v1613
      %v1615 = vpop.f32.mrb[0].mxu0
      %1616 = vdwg.mxu0
      %v1617 = vxor.u32 %v1491, 2147483648
      %v1618 = vxor.u32 %v1494, 2147483648
      %v1619 = vxor.u32 %v1499, 2147483648
      %v1620 = vxor.u32 %v1502, 2147483648
      %v1621 = vxor.u32 %v1507, 2147483648
      %v1622 = vxor.u32 %v1510, 2147483648
      %v1623 = vxor.u32 %v1515, 2147483648
      %v1624 = vxor.u32 %v1518, 2147483648
      %v1625 = vxor.u32 %v1523, 2147483648
      %v1626 = vxor.u32 %v1526, 2147483648
      %v1627 = vxor.u32 %v1531, 2147483648
      %v1628 = vxor.u32 %v1534, 2147483648
      %v1629 = vxor.u32 %v1539, 2147483648
      %v1630 = vxor.u32 %v1542, 2147483648
      %v1631 = vxor.u32 %v1547, 2147483648
      %v1632 = vxor.u32 %v1550, 2147483648
      %v1633 = vxor.u32 %v1555, 2147483648
      %v1634 = vxor.u32 %v1558, 2147483648
      %v1635 = vxor.u32 %v1563, 2147483648
      %v1636 = vxor.u32 %v1566, 2147483648
      %v1637 = vxor.u32 %v1571, 2147483648
      %v1638 = vxor.u32 %v1574, 2147483648
      %v1639 = vxor.u32 %v1579, 2147483648
      %v1640 = vxor.u32 %v1582, 2147483648
      %v1641 = vxor.u32 %v1587, 2147483648
      %v1642 = vxor.u32 %v1590, 2147483648
      %v1643 = vxor.u32 %v1595, 2147483648
      %v1644 = vxor.u32 %v1598, 2147483648
      %v1645 = vxor.u32 %v1603, 2147483648
      %v1646 = vxor.u32 %v1606, 2147483648
      %v1647 = vxor.u32 %v1611, 2147483648
      %v1648 = vxor.u32 %v1614, 2147483648
      %v1649 = vmul.f32 %v1617, 1.442695
      %v1650 = vpow.pop %v1649
      %v1651 = vmul.f32 %v1618, 1.442695
      %v1652 = vpow.pop %v1651
      %v1653 = vmul.f32 %v1619, 1.442695
      %v1654 = vpow.pop %v1653
      %v1655 = vmul.f32 %v1620, 1.442695
      %v1656 = vpow.pop %v1655
      %v1657 = vmul.f32 %v1621, 1.442695
      %v1658 = vpow.pop %v1657
      %v1659 = vmul.f32 %v1622, 1.442695
      %v1660 = vpow.pop %v1659
      %v1661 = vmul.f32 %v1623, 1.442695
      %v1662 = vpow.pop %v1661
      %v1663 = vmul.f32 %v1624, 1.442695
      %v1664 = vpow.pop %v1663
      %v1665 = vmul.f32 %v1625, 1.442695
      %v1666 = vpow.pop %v1665
      %v1667 = vmul.f32 %v1626, 1.442695
      %v1668 = vpow.pop %v1667
      %v1669 = vmul.f32 %v1627, 1.442695
      %v1670 = vpow.pop %v1669
      %v1671 = vmul.f32 %v1628, 1.442695
      %v1672 = vpow.pop %v1671
      %v1673 = vmul.f32 %v1629, 1.442695
      %v1674 = vpow.pop %v1673
      %v1675 = vmul.f32 %v1630, 1.442695
      %v1676 = vpow.pop %v1675
      %v1677 = vmul.f32 %v1631, 1.442695
      %v1678 = vpow.pop %v1677
      %v1679 = vmul.f32 %v1632, 1.442695
      %v1680 = vpow.pop %v1679
      %v1681 = vmul.f32 %v1633, 1.442695
      %v1682 = vpow.pop %v1681
      %v1683 = vmul.f32 %v1634, 1.442695
      %v1684 = vpow.pop %v1683
      %v1685 = vmul.f32 %v1635, 1.442695
      %v1686 = vpow.pop %v1685
      %v1687 = vmul.f32 %v1636, 1.442695
      %v1688 = vpow.pop %v1687
      %v1689 = vmul.f32 %v1637, 1.442695
      %v1690 = vpow.pop %v1689
      %v1691 = vmul.f32 %v1638, 1.442695
      %v1692 = vpow.pop %v1691
      %v1693 = vmul.f32 %v1639, 1.442695
      %v1694 = vpow.pop %v1693
      %v1695 = vmul.f32 %v1640, 1.442695
      %v1696 = vpow.pop %v1695
      %v1697 = vmul.f32 %v1641, 1.442695
      %v1698 = vpow.pop %v1697
      %v1699 = vmul.f32 %v1642, 1.442695
      %v1700 = vpow.pop %v1699
      %v1701 = vmul.f32 %v1643, 1.442695
      %v1702 = vpow.pop %v1701
      %v1703 = vmul.f32 %v1644, 1.442695
      %v1704 = vpow.pop %v1703
      %v1705 = vmul.f32 %v1645, 1.442695
      %v1706 = vpow.pop %v1705
      %v1707 = vmul.f32 %v1646, 1.442695
      %v1708 = vpow.pop %v1707
      %v1709 = vmul.f32 %v1647, 1.442695
      %v1710 = vpow.pop %v1709
      %v1711 = vmul.f32 %v1648, 1.442695
      %v1712 = vpow.pop %v1711
      %v1713 = vadd.f32 %v1650, 1.0
      %v1714 = vadd.f32 %v1652, 1.0
      %v1715 = vadd.f32 %v1654, 1.0
      %v1716 = vadd.f32 %v1656, 1.0
      %v1717 = vadd.f32 %v1658, 1.0
      %v1718 = vadd.f32 %v1660, 1.0
      %v1719 = vadd.f32 %v1662, 1.0
      %v1720 = vadd.f32 %v1664, 1.0
      %v1721 = vadd.f32 %v1666, 1.0
      %v1722 = vadd.f32 %v1668, 1.0
      %v1723 = vadd.f32 %v1670, 1.0
      %v1724 = vadd.f32 %v1672, 1.0
      %v1725 = vadd.f32 %v1674, 1.0
      %v1726 = vadd.f32 %v1676, 1.0
      %v1727 = vadd.f32 %v1678, 1.0
      %v1728 = vadd.f32 %v1680, 1.0
      %v1729 = vadd.f32 %v1682, 1.0
      %v1730 = vadd.f32 %v1684, 1.0
      %v1731 = vadd.f32 %v1686, 1.0
      %v1732 = vadd.f32 %v1688, 1.0
      %v1733 = vadd.f32 %v1690, 1.0
      %v1734 = vadd.f32 %v1692, 1.0
      %v1735 = vadd.f32 %v1694, 1.0
      %v1736 = vadd.f32 %v1696, 1.0
      %v1737 = vadd.f32 %v1698, 1.0
      %v1738 = vadd.f32 %v1700, 1.0
      %v1739 = vadd.f32 %v1702, 1.0
      %v1740 = vadd.f32 %v1704, 1.0
      %v1741 = vadd.f32 %v1706, 1.0
      %v1742 = vadd.f32 %v1708, 1.0
      %v1743 = vadd.f32 %v1710, 1.0
      %v1744 = vadd.f32 %v1712, 1.0
      %v1745 = vrcp.pop %v1713
      %v1746 = vmul.f32 1.0, %v1745
      %v1747 = vrcp.pop %v1714
      %v1748 = vmul.f32 1.0, %v1747
      %v1749 = vrcp.pop %v1715
      %v1750 = vmul.f32 1.0, %v1749
      %v1751 = vrcp.pop %v1716
      %v1752 = vmul.f32 1.0, %v1751
      %v1753 = vrcp.pop %v1717
      %v1754 = vmul.f32 1.0, %v1753
      %v1755 = vrcp.pop %v1718
      %v1756 = vmul.f32 1.0, %v1755
      %v1757 = vrcp.pop %v1719
      %v1758 = vmul.f32 1.0, %v1757
      %v1759 = vrcp.pop %v1720
      %v1760 = vmul.f32 1.0, %v1759
      %v1761 = vrcp.pop %v1721
      %v1762 = vmul.f32 1.0, %v1761
      %v1763 = vrcp.pop %v1722
      %v1764 = vmul.f32 1.0, %v1763
      %v1765 = vrcp.pop %v1723
      %v1766 = vmul.f32 1.0, %v1765
      %v1767 = vrcp.pop %v1724
      %v1768 = vmul.f32 1.0, %v1767
      %v1769 = vrcp.pop %v1725
      %v1770 = vmul.f32 1.0, %v1769
      %v1771 = vrcp.pop %v1726
      %v1772 = vmul.f32 1.0, %v1771
      %v1773 = vrcp.pop %v1727
      %v1774 = vmul.f32 1.0, %v1773
      %v1775 = vrcp.pop %v1728
      %v1776 = vmul.f32 1.0, %v1775
      %v1777 = vrcp.pop %v1729
      %v1778 = vmul.f32 1.0, %v1777
      %v1779 = vrcp.pop %v1730
      %v1780 = vmul.f32 1.0, %v1779
      %v1781 = vrcp.pop %v1731
      %v1782 = vmul.f32 1.0, %v1781
      %v1783 = vrcp.pop %v1732
      %v1784 = vmul.f32 1.0, %v1783
      %v1785 = vrcp.pop %v1733
      %v1786 = vmul.f32 1.0, %v1785
      %v1787 = vrcp.pop %v1734
      %v1788 = vmul.f32 1.0, %v1787
      %v1789 = vrcp.pop %v1735
      %v1790 = vmul.f32 1.0, %v1789
      %v1791 = vrcp.pop %v1736
      %v1792 = vmul.f32 1.0, %v1791
      %v1793 = vrcp.pop %v1737
      %v1794 = vmul.f32 1.0, %v1793
      %v1795 = vrcp.pop %v1738
      %v1796 = vmul.f32 1.0, %v1795
      %v1797 = vrcp.pop %v1739
      %v1798 = vmul.f32 1.0, %v1797
      %v1799 = vrcp.pop %v1740
      %v1800 = vmul.f32 1.0, %v1799
      %v1801 = vrcp.pop %v1741
      %v1802 = vmul.f32 1.0, %v1801
      %v1803 = vrcp.pop %v1742
      %v1804 = vmul.f32 1.0, %v1803
      %v1805 = vrcp.pop %v1743
      %v1806 = vmul.f32 1.0, %v1805
      %v1807 = vrcp.pop %v1744
      %v1808 = vmul.f32 1.0, %v1807
      %1809 = vst [vmem:[%s356] sm:$0xff] %v1746
      %1810 = vst [vmem:[%s356 + $0x8] sm:$0xff] %v1748
      %1811 = vst [vmem:[%s356 + $0x10] sm:$0xff] %v1750
      %1812 = vst [vmem:[%s356 + $0x18] sm:$0xff] %v1752
      %1813 = vst [vmem:[%s356 + $0x20] sm:$0xff] %v1754
      %1814 = vst [vmem:[%s356 + $0x28] sm:$0xff] %v1756
      %1815 = vst [vmem:[%s356 + $0x30] sm:$0xff] %v1758
      %1816 = vst [vmem:[%s356 + $0x38] sm:$0xff] %v1760
      %1817 = vst [vmem:[%s356 + $0x40] sm:$0xff] %v1762
      %1818 = vst [vmem:[%s356 + $0x48] sm:$0xff] %v1764
      %1819 = vst [vmem:[%s356 + $0x50] sm:$0xff] %v1766
      %1820 = vst [vmem:[%s356 + $0x58] sm:$0xff] %v1768
      %1821 = vst [vmem:[%s356 + $0x60] sm:$0xff] %v1770
      %1822 = vst [vmem:[%s356 + $0x68] sm:$0xff] %v1772
      %1823 = vst [vmem:[%s356 + $0x70] sm:$0xff] %v1774
      %1824 = vst [vmem:[%s356 + $0x78] sm:$0xff] %v1776
      %1825 = vst [vmem:[%s356 + $0x80] sm:$0xff] %v1778
      %1826 = vst [vmem:[%s356 + $0x88] sm:$0xff] %v1780
      %1827 = vst [vmem:[%s356 + $0x90] sm:$0xff] %v1782
      %1828 = vst [vmem:[%s356 + $0x98] sm:$0xff] %v1784
      %1829 = vst [vmem:[%s356 + $0xa0] sm:$0xff] %v1786
      %1830 = vst [vmem:[%s356 + $0xa8] sm:$0xff] %v1788
      %1831 = vst [vmem:[%s356 + $0xb0] sm:$0xff] %v1790
      %1832 = vst [vmem:[%s356 + $0xb8] sm:$0xff] %v1792
      %1833 = vst [vmem:[%s356 + $0xc0] sm:$0xff] %v1794
      %1834 = vst [vmem:[%s356 + $0xc8] sm:$0xff] %v1796
      %1835 = vst [vmem:[%s356 + $0xd0] sm:$0xff] %v1798
      %1836 = vst [vmem:[%s356 + $0xd8] sm:$0xff] %v1800
      %1837 = vst [vmem:[%s356 + $0xe0] sm:$0xff] %v1802
      %1838 = vst [vmem:[%s356 + $0xe8] sm:$0xff] %v1804
      %1839 = vst [vmem:[%s356 + $0xf0] sm:$0xff] %v1806
      %1840 = vst [vmem:[%s356 + $0xf8] sm:$0xff] %v1808
      %s1841 = smul.u32 32, %s20
      %p1842 = scmp.lt.s32.totalorder %s1841, 63
      %s1843 = scalar_select %p1842, %s1841, 63
      %s1844 = smul.addr %s1843, 8
      %s1845 = scalar_lea.vmem %s9, %s1844
      // Predicated region
      $region57: #{_lambda_.1} parent=55 // pred_check
        %p1846 = pneg %p237
      $region58: #{_lambda_.1} parent=55 // pred_check_branch
        %1848 = sbr.rel (%p1846) target = $region60
      $region59: #{_lambda_.1} parent=55 // pred_region
        %s1849 = smul.u32 32, %s20
      $region60: #{_lambda_.1} parent=55 // pred_fallthru
        _
    $region56: #{_lambda_.1} parent=5 // pred_fallthru
      _
    %p1850 = scmp.le.s32.totalorder 2, %s15
    // Predicated region
    $region61: #{_lambda_.1} parent=5 // pred_check
      %p1851 = pneg %p1850
    $region62: #{_lambda_.1} parent=5 // pred_check_branch
      %1853 = sbr.rel (%p1851) target = $region64
    $region63: #{_lambda_.1} parent=5 // pred_region
      %s1854 = ssub.s32 %s15, 2
      // Predicated region
      $region65: #{_lambda_.1} parent=63 // pred_check
        %p1855 = pneg %p243
      $region66: #{_lambda_.1} parent=63 // pred_check_branch
        %1857 = sbr.rel (%p1855) target = $region68
      $region67: #{_lambda_.1} parent=63 // pred_region
        %s1858 = smul.u32 32, %s21
        %p1859 = scmp.lt.s32.totalorder %s1858, 63
        %s1860 = scalar_select %p1859, %s1858, 63
        %s1861 = smul.addr %s1860, 8
        %s1862 = scalar_lea.vmem %s9, %s1861
      $region68: #{_lambda_.1} parent=63 // pred_fallthru
        _
    $region64: #{_lambda_.1} parent=5 // pred_fallthru
      _
  $region6: #{_lambda_.1} parent=0 // loop_footer
    %s19 = sadd.s32 1, %s15
  $region7: #{_lambda_.1} parent=0 // loop_footer_branch
    %14 = sbr.rel target = $region3
  $region8: #{_lambda_.1} parent=0 // loop_exit
    _

</llo_original>
